<compile_context>
chip_gen: v7x
topology: tpu7x:2x2x1
jax: 0.10.0
libtpu: 0.0.40
codegen_flags: <defaults>
</compile_context>

<pallas_src>
import functools

import jax
import jax.numpy as jnp
from jax.experimental import pallas as pl
from jax.experimental.pallas import tpu as pltpu


# ------------------------------ fused kernel ---------------------------------
def _input_conv_kernel(x_ref, m_ref, wh_ref, bh_ref, w1_ref, b1_ref,
                       w2_ref, b2_ref, o_ref, patch_ref, *, H, W):
    """One batch element per grid step; all intermediates stay in VMEM.

    x_ref    : (1, Cin, H*W)   f32  input image, channel-major / lane-dense
    m_ref    : (9, H*W)        f32  0/1 validity mask per 3x3 tap (in-kernel zero pad)
    w*_ref   : (Cout, 9*Cin)        im2col'ed conv weights (bf16 or f32)
    b*_ref   : (Cout, 1)       f32  biases
    o_ref    : (1, Cout, H*W)  f32  output
    patch_ref: (9*maxC, H*W)   f32  VMEM scratch holding the im2col patch tile
    """
    HW = H * W

    def conv3x3(x, w_ref, b_ref, relu):
        C = x.shape[0]
        # Build the (9*C, HW) im2col tile: tap (kh, kw) is the input rolled by
        # -(dh*W + dw) along the flat spatial (lane) axis, with out-of-image
        # positions zeroed by the precomputed mask (replaces wrapper-side jnp.pad
        # and the unaligned slice+reshape copies of the old kernel).
        for kh in range(3):
            for kw in range(3):
                dh, dw = kh - 1, kw - 1
                k = kh * 3 + kw
                d = dh * W + dw
                piece = x if d == 0 else pltpu.roll(x, shift=(-d) % HW, axis=1)
                if d != 0:
                    piece = piece * m_ref[k:k + 1, :]
                patch_ref[k * C:(k + 1) * C, :] = piece
        # One deep-K matmul on the MXU; operands in w_ref.dtype (bf16/f32), f32 accum.
        acc = jnp.dot(w_ref[...], patch_ref[0:9 * C, :].astype(w_ref.dtype),
                      preferred_element_type=jnp.float32)
        acc = acc + b_ref[...]                      # (Cout, 1) broadcast over lanes
        return jnp.maximum(acc, 0.0) if relu else acc

    x1 = conv3x3(x_ref[0], wh_ref, bh_ref, relu=True)     # head: conv + ReLU
    t = conv3x3(x1, w1_ref, b1_ref, relu=True)            # ResBlock conv1 + ReLU
    y = conv3x3(t, w2_ref, b2_ref, relu=False)            # ResBlock conv2
    # ResBlock identity + InputConv global skip, fused on the f32 accumulator.
    o_ref[0] = (y + 2.0 * x1).astype(o_ref.dtype)


# -------------------------------- wrapper -------------------------------------
def _im2col_weight(w_hwio, dtype):
    """(3,3,Cin,Cout) HWIO -> (Cout, 9*Cin), rows match the kernel's patch layout."""
    kh, kw, ci, co = w_hwio.shape
    return jnp.transpose(w_hwio, (3, 0, 1, 2)).reshape(co, kh * kw * ci).astype(dtype)


def _tap_masks(H, W):
    """(9, H*W) 0/1 masks: tap (kh,kw) is valid where the shifted pixel is in-image."""
    h = jnp.repeat(jnp.arange(H), W)
    w = jnp.tile(jnp.arange(W), H)
    rows = []
    for dh in (-1, 0, 1):
        for dw in (-1, 0, 1):
            rows.append((h + dh >= 0) & (h + dh < H) & (w + dw >= 0) & (w + dw < W))
    return jnp.stack(rows).astype(jnp.float32)


@functools.partial(jax.jit, static_argnames=("mxu_dtype",))
def input_conv_forward(x_nchw, params, mxu_dtype=jnp.bfloat16):
    """Reproduces InputConv(in_nc, outch, nb=2).forward on an NCHW input."""
    N, Cin, H, W = x_nchw.shape
    Cout = params["w_head"].shape[-1]
    HW = H * W

    x = x_nchw.reshape(N, Cin, HW)                 # NCHW -> (N, C, H*W), free reshape
    masks = _tap_masks(H, W)
    wh = _im2col_weight(params["w_head"], mxu_dtype)
    w1 = _im2col_weight(params["w1"], mxu_dtype)
    w2 = _im2col_weight(params["w2"], mxu_dtype)
    bh = params["b_head"].reshape(Cout, 1).astype(jnp.float32)
    b1 = params["b1"].reshape(Cout, 1).astype(jnp.float32)
    b2 = params["b2"].reshape(Cout, 1).astype(jnp.float32)

    const = lambda n: (0, 0)   # resident blocks: masks / weights / biases

    # TODO(synk): for large frames, tile over rows with a 3-row halo (and give the grid
    # more parallel steps for v7x's 2 TensorCores / 64 MiB VMEM) instead of mapping one
    # whole image per grid step.
    out = pl.pallas_call(
        functools.partial(_input_conv_kernel, H=H, W=W),
        out_shape=jax.ShapeDtypeStruct((N, Cout, HW), jnp.float32),
        grid=(N,),
        in_specs=[
            pl.BlockSpec((1, Cin, HW), lambda n: (n, 0, 0)),
            pl.BlockSpec((9, HW), const),
            pl.BlockSpec((Cout, 9 * Cin), const),
            pl.BlockSpec((Cout, 1), const),
            pl.BlockSpec((Cout, 9 * Cout), const),
            pl.BlockSpec((Cout, 1), const),
            pl.BlockSpec((Cout, 9 * Cout), const),
            pl.BlockSpec((Cout, 1), const),
        ],
        out_specs=pl.BlockSpec((1, Cout, HW), lambda n: (n, 0, 0)),
        scratch_shapes=[pltpu.VMEM((9 * max(Cin, Cout), HW), jnp.float32)],
        compiler_params=pltpu.CompilerParams(dimension_semantics=("parallel",)),
    )(x, masks, wh, bh, w1, b1, w2, b2)

    return out.reshape(N, Cout, H, W)              # -> NCHW, free reshape


def init_params(key, in_nc, outch):
    ks = jax.random.split(key, 6)
    s = 0.1
    return {
        "w_head": s * jax.random.normal(ks[0], (3, 3, in_nc, outch), jnp.float32),
        "b_head": s * jax.random.normal(ks[1], (outch,), jnp.float32),
        "w1": s * jax.random.normal(ks[2], (3, 3, outch, outch), jnp.float32),
        "b1": s * jax.random.normal(ks[3], (outch,), jnp.float32),
        "w2": s * jax.random.normal(ks[4], (3, 3, outch, outch), jnp.float32),
        "b2": s * jax.random.normal(ks[5], (outch,), jnp.float32),
    }


# ------------------------------- reference ------------------------------------
def _ref_conv(x_nchw, w_hwio, b):
    y = jax.lax.conv_general_dilated(
        x_nchw, w_hwio, window_strides=(1, 1), padding="SAME",
        dimension_numbers=("NCHW", "HWIO", "NCHW"))
    return y + b.reshape(1, -1, 1, 1)


def reference_forward(x_nchw, params):
    x1 = jax.nn.relu(_ref_conv(x_nchw, params["w_head"], params["b_head"]))
    t = jax.nn.relu(_ref_conv(x1, params["w1"], params["b1"]))
    return _ref_conv(t, params["w2"], params["b2"]) + 2.0 * x1


# --------------------------------- main ----------------------------------------
if __name__ == "__main__":
    key = jax.random.PRNGKey(0)
    kx, kp = jax.random.split(key)

    N, in_nc, H, W = 2, 4, 16, 16
    outch = 32

    x = jax.random.normal(kx, (N, in_nc, H, W), jnp.float32)   # NCHW, like PyTorch
    params = init_params(kp, in_nc, outch)

    ref = reference_forward(x, params)

    # Exact path (f32 MXU operands): tight tolerance vs. the XLA conv reference.
    out_f32 = jax.block_until_ready(
        input_conv_forward(x, params, mxu_dtype=jnp.float32))
    assert out_f32.shape == (N, outch, H, W)
    assert jnp.allclose(out_f32, ref, rtol=1e-4, atol=1e-4), "f32 kernel mismatch"

    # Fast path (bf16 MXU operands, f32 accumulation) - v6e/v7x recommendation.
    out_bf16 = jax.block_until_ready(
        input_conv_forward(x, params, mxu_dtype=jnp.bfloat16))
    assert out_bf16.shape == (N, outch, H, W)
    assert jnp.allclose(out_bf16, ref, rtol=5e-2, atol=1e-1), "bf16 kernel mismatch"

    print("KERNEL_OK")
</pallas_src>

<mosaic_0001>
module attributes {stable_mosaic.version = 11 : i64} {
  func.func @_input_conv_kernel(%arg0: i32, %arg1: memref<1x4x256xf32, #tpu.memory_space<vmem>>, %arg2: memref<9x256xf32, #tpu.memory_space<vmem>>, %arg3: memref<32x36xf32, #tpu.memory_space<vmem>>, %arg4: memref<32x1xf32, #tpu.memory_space<vmem>>, %arg5: memref<32x288xf32, #tpu.memory_space<vmem>>, %arg6: memref<32x1xf32, #tpu.memory_space<vmem>>, %arg7: memref<32x288xf32, #tpu.memory_space<vmem>>, %arg8: memref<32x1xf32, #tpu.memory_space<vmem>>, %arg9: memref<1x32x256xf32, #tpu.memory_space<vmem>>, %arg10: memref<288x256xf32, #tpu.memory_space<vmem>>) attributes {dimension_semantics = [#tpu.dimension_semantics<parallel>], iteration_bounds = array<i64: 2>, scalar_prefetch = 0 : i64, scratch_operands = 1 : i64, tpu.core_type = #tpu.core_type<tc>, window_params = [{transform_indices = @transform_0, window_bounds = array<i64: 1, 4, 256>}, {pipeline_mode = #tpu.pipeline_mode<synchronous>, transform_indices = @transform_1, window_bounds = array<i64: 9, 256>}, {pipeline_mode = #tpu.pipeline_mode<synchronous>, transform_indices = @transform_2, window_bounds = array<i64: 32, 36>}, {pipeline_mode = #tpu.pipeline_mode<synchronous>, transform_indices = @transform_3, window_bounds = array<i64: 32, 1>}, {pipeline_mode = #tpu.pipeline_mode<synchronous>, transform_indices = @transform_4, window_bounds = array<i64: 32, 288>}, {pipeline_mode = #tpu.pipeline_mode<synchronous>, transform_indices = @transform_5, window_bounds = array<i64: 32, 1>}, {pipeline_mode = #tpu.pipeline_mode<synchronous>, transform_indices = @transform_6, window_bounds = array<i64: 32, 288>}, {pipeline_mode = #tpu.pipeline_mode<synchronous>, transform_indices = @transform_7, window_bounds = array<i64: 32, 1>}, {transform_indices = @transform_8, window_bounds = array<i64: 1, 32, 256>}]} {
    %c0 = arith.constant 0 : index
    %c0_0 = arith.constant 0 : index
    %c0_1 = arith.constant 0 : index
    %0 = vector.load %arg1[%c0, %c0_0, %c0_1] : memref<1x4x256xf32, #tpu.memory_space<vmem>>, vector<1x4x256xf32>
    %1 = vector.shape_cast %0 : vector<1x4x256xf32> to vector<4x256xf32>
    %c17_i32 = arith.constant 17 : i32
    %2 = tpu.dynamic_rotate %1 by %c17_i32 dim 1 : vector<4x256xf32>, i32 -> vector<4x256xf32>
    %c0_2 = arith.constant 0 : index
    %c0_3 = arith.constant 0 : index
    %3 = vector.load %arg2[%c0_2, %c0_3] : memref<9x256xf32, #tpu.memory_space<vmem>>, vector<1x256xf32>
    %4 = vector.broadcast %3 : vector<1x256xf32> to vector<4x256xf32>
    %5 = arith.mulf %2, %4 : vector<4x256xf32>
    %c0_4 = arith.constant 0 : index
    %c0_5 = arith.constant 0 : index
    %6 = vector.load %arg10[%c0_4, %c0_5] : memref<288x256xf32, #tpu.memory_space<vmem>>, vector<4x256xf32>
    tpu.vector_store %arg10[%c0_4, %c0_5], %5 {strides = array<i32>} : memref<288x256xf32, #tpu.memory_space<vmem>>, vector<4x256xf32>,
    %c16_i32 = arith.constant 16 : i32
    %7 = tpu.dynamic_rotate %1 by %c16_i32 dim 1 : vector<4x256xf32>, i32 -> vector<4x256xf32>
    %c1 = arith.constant 1 : index
    %c0_6 = arith.constant 0 : index
    %8 = vector.load %arg2[%c1, %c0_6] : memref<9x256xf32, #tpu.memory_space<vmem>>, vector<1x256xf32>
    %9 = vector.broadcast %8 : vector<1x256xf32> to vector<4x256xf32>
    %10 = arith.mulf %7, %9 : vector<4x256xf32>
    %c4 = arith.constant 4 : index
    %c0_7 = arith.constant 0 : index
    %11 = vector.load %arg10[%c4, %c0_7] : memref<288x256xf32, #tpu.memory_space<vmem>>, vector<4x256xf32>
    tpu.vector_store %arg10[%c4, %c0_7], %10 {strides = array<i32>} : memref<288x256xf32, #tpu.memory_space<vmem>>, vector<4x256xf32>,
    %c15_i32 = arith.constant 15 : i32
    %12 = tpu.dynamic_rotate %1 by %c15_i32 dim 1 : vector<4x256xf32>, i32 -> vector<4x256xf32>
    %c2 = arith.constant 2 : index
    %c0_8 = arith.constant 0 : index
    %13 = vector.load %arg2[%c2, %c0_8] : memref<9x256xf32, #tpu.memory_space<vmem>>, vector<1x256xf32>
    %14 = vector.broadcast %13 : vector<1x256xf32> to vector<4x256xf32>
    %15 = arith.mulf %12, %14 : vector<4x256xf32>
    %c8 = arith.constant 8 : index
    %c0_9 = arith.constant 0 : index
    %16 = vector.load %arg10[%c8, %c0_9] : memref<288x256xf32, #tpu.memory_space<vmem>>, vector<4x256xf32>
    tpu.vector_store %arg10[%c8, %c0_9], %15 {strides = array<i32>} : memref<288x256xf32, #tpu.memory_space<vmem>>, vector<4x256xf32>,
    %c1_i32 = arith.constant 1 : i32
    %17 = tpu.dynamic_rotate %1 by %c1_i32 dim 1 : vector<4x256xf32>, i32 -> vector<4x256xf32>
    %c3 = arith.constant 3 : index
    %c0_10 = arith.constant 0 : index
    %18 = vector.load %arg2[%c3, %c0_10] : memref<9x256xf32, #tpu.memory_space<vmem>>, vector<1x256xf32>
    %19 = vector.broadcast %18 : vector<1x256xf32> to vector<4x256xf32>
    %20 = arith.mulf %17, %19 : vector<4x256xf32>
    %c12 = arith.constant 12 : index
    %c0_11 = arith.constant 0 : index
    %21 = vector.load %arg10[%c12, %c0_11] : memref<288x256xf32, #tpu.memory_space<vmem>>, vector<4x256xf32>
    tpu.vector_store %arg10[%c12, %c0_11], %20 {strides = array<i32>} : memref<288x256xf32, #tpu.memory_space<vmem>>, vector<4x256xf32>,
    %c16 = arith.constant 16 : index
    %c0_12 = arith.constant 0 : index
    %22 = vector.load %arg10[%c16, %c0_12] : memref<288x256xf32, #tpu.memory_space<vmem>>, vector<4x256xf32>
    tpu.vector_store %arg10[%c16, %c0_12], %1 {strides = array<i32>} : memref<288x256xf32, #tpu.memory_space<vmem>>, vector<4x256xf32>,
    %c255_i32 = arith.constant 255 : i32
    %23 = tpu.dynamic_rotate %1 by %c255_i32 dim 1 : vector<4x256xf32>, i32 -> vector<4x256xf32>
    %c5 = arith.constant 5 : index
    %c0_13 = arith.constant 0 : index
    %24 = vector.load %arg2[%c5, %c0_13] : memref<9x256xf32, #tpu.memory_space<vmem>>, vector<1x256xf32>
    %25 = vector.broadcast %24 : vector<1x256xf32> to vector<4x256xf32>
    %26 = arith.mulf %23, %25 : vector<4x256xf32>
    %c20 = arith.constant 20 : index
    %c0_14 = arith.constant 0 : index
    %27 = vector.load %arg10[%c20, %c0_14] : memref<288x256xf32, #tpu.memory_space<vmem>>, vector<4x256xf32>
    tpu.vector_store %arg10[%c20, %c0_14], %26 {strides = array<i32>} : memref<288x256xf32, #tpu.memory_space<vmem>>, vector<4x256xf32>,
    %c241_i32 = arith.constant 241 : i32
    %28 = tpu.dynamic_rotate %1 by %c241_i32 dim 1 : vector<4x256xf32>, i32 -> vector<4x256xf32>
    %c6 = arith.constant 6 : index
    %c0_15 = arith.constant 0 : index
    %29 = vector.load %arg2[%c6, %c0_15] : memref<9x256xf32, #tpu.memory_space<vmem>>, vector<1x256xf32>
    %30 = vector.broadcast %29 : vector<1x256xf32> to vector<4x256xf32>
    %31 = arith.mulf %28, %30 : vector<4x256xf32>
    %c24 = arith.constant 24 : index
    %c0_16 = arith.constant 0 : index
    %32 = vector.load %arg10[%c24, %c0_16] : memref<288x256xf32, #tpu.memory_space<vmem>>, vector<4x256xf32>
    tpu.vector_store %arg10[%c24, %c0_16], %31 {strides = array<i32>} : memref<288x256xf32, #tpu.memory_space<vmem>>, vector<4x256xf32>,
    %c240_i32 = arith.constant 240 : i32
    %33 = tpu.dynamic_rotate %1 by %c240_i32 dim 1 : vector<4x256xf32>, i32 -> vector<4x256xf32>
    %c7 = arith.constant 7 : index
    %c0_17 = arith.constant 0 : index
    %34 = vector.load %arg2[%c7, %c0_17] : memref<9x256xf32, #tpu.memory_space<vmem>>, vector<1x256xf32>
    %35 = vector.broadcast %34 : vector<1x256xf32> to vector<4x256xf32>
    %36 = arith.mulf %33, %35 : vector<4x256xf32>
    %c28 = arith.constant 28 : index
    %c0_18 = arith.constant 0 : index
    %37 = vector.load %arg10[%c28, %c0_18] : memref<288x256xf32, #tpu.memory_space<vmem>>, vector<4x256xf32>
    tpu.vector_store %arg10[%c28, %c0_18], %36 {strides = array<i32>} : memref<288x256xf32, #tpu.memory_space<vmem>>, vector<4x256xf32>,
    %c239_i32 = arith.constant 239 : i32
    %38 = tpu.dynamic_rotate %1 by %c239_i32 dim 1 : vector<4x256xf32>, i32 -> vector<4x256xf32>
    %c8_19 = arith.constant 8 : index
    %c0_20 = arith.constant 0 : index
    %39 = vector.load %arg2[%c8_19, %c0_20] : memref<9x256xf32, #tpu.memory_space<vmem>>, vector<1x256xf32>
    %40 = vector.broadcast %39 : vector<1x256xf32> to vector<4x256xf32>
    %41 = arith.mulf %38, %40 : vector<4x256xf32>
    %c32 = arith.constant 32 : index
    %c0_21 = arith.constant 0 : index
    %42 = vector.load %arg10[%c32, %c0_21] : memref<288x256xf32, #tpu.memory_space<vmem>>, vector<4x256xf32>
    tpu.vector_store %arg10[%c32, %c0_21], %41 {strides = array<i32>} : memref<288x256xf32, #tpu.memory_space<vmem>>, vector<4x256xf32>,
    %c0_22 = arith.constant 0 : index
    %c0_23 = arith.constant 0 : index
    %43 = vector.load %arg3[%c0_22, %c0_23] : memref<32x36xf32, #tpu.memory_space<vmem>>, vector<32x36xf32>
    %c0_24 = arith.constant 0 : index
    %c0_25 = arith.constant 0 : index
    %44 = vector.load %arg10[%c0_24, %c0_25] : memref<288x256xf32, #tpu.memory_space<vmem>>, vector<36x256xf32>
    %cst = arith.constant dense<0.000000e+00> : vector<32x256xf32>
    %45 = tpu.matmul %43, %44, %cst {dimension_numbers = #tpu.dot_dimension_numbers<[1], [0], [0], [1], [0, 0, 1, 1], [], []>} : vector<32x36xf32>, vector<36x256xf32>, vector<32x256xf32> -> vector<32x256xf32>
    %c0_26 = arith.constant 0 : index
    %c0_27 = arith.constant 0 : index
    %46 = vector.load %arg4[%c0_26, %c0_27] : memref<32x1xf32, #tpu.memory_space<vmem>>, vector<32x1xf32>
    %47 = vector.broadcast %46 : vector<32x1xf32> to vector<32x256xf32>
    %48 = arith.addf %45, %47 : vector<32x256xf32>
    %cst_28 = arith.constant 0.000000e+00 : f32
    %49 = vector.broadcast %cst_28 : f32 to vector<32x256xf32>
    %50 = arith.maximumf %48, %49 : vector<32x256xf32>
    %c17_i32_29 = arith.constant 17 : i32
    %51 = tpu.dynamic_rotate %50 by %c17_i32_29 dim 1 : vector<32x256xf32>, i32 -> vector<32x256xf32>
    %c0_30 = arith.constant 0 : index
    %c0_31 = arith.constant 0 : index
    %52 = vector.load %arg2[%c0_30, %c0_31] : memref<9x256xf32, #tpu.memory_space<vmem>>, vector<1x256xf32>
    %53 = vector.broadcast %52 : vector<1x256xf32> to vector<32x256xf32>
    %54 = arith.mulf %51, %53 : vector<32x256xf32>
    %c0_32 = arith.constant 0 : index
    %c0_33 = arith.constant 0 : index
    %55 = vector.load %arg10[%c0_32, %c0_33] : memref<288x256xf32, #tpu.memory_space<vmem>>, vector<32x256xf32>
    tpu.vector_store %arg10[%c0_32, %c0_33], %54 {strides = array<i32>} : memref<288x256xf32, #tpu.memory_space<vmem>>, vector<32x256xf32>,
    %c16_i32_34 = arith.constant 16 : i32
    %56 = tpu.dynamic_rotate %50 by %c16_i32_34 dim 1 : vector<32x256xf32>, i32 -> vector<32x256xf32>
    %c1_35 = arith.constant 1 : index
    %c0_36 = arith.constant 0 : index
    %57 = vector.load %arg2[%c1_35, %c0_36] : memref<9x256xf32, #tpu.memory_space<vmem>>, vector<1x256xf32>
    %58 = vector.broadcast %57 : vector<1x256xf32> to vector<32x256xf32>
    %59 = arith.mulf %56, %58 : vector<32x256xf32>
    %c32_37 = arith.constant 32 : index
    %c0_38 = arith.constant 0 : index
    %60 = vector.load %arg10[%c32_37, %c0_38] : memref<288x256xf32, #tpu.memory_space<vmem>>, vector<32x256xf32>
    tpu.vector_store %arg10[%c32_37, %c0_38], %59 {strides = array<i32>} : memref<288x256xf32, #tpu.memory_space<vmem>>, vector<32x256xf32>,
    %c15_i32_39 = arith.constant 15 : i32
    %61 = tpu.dynamic_rotate %50 by %c15_i32_39 dim 1 : vector<32x256xf32>, i32 -> vector<32x256xf32>
    %c2_40 = arith.constant 2 : index
    %c0_41 = arith.constant 0 : index
    %62 = vector.load %arg2[%c2_40, %c0_41] : memref<9x256xf32, #tpu.memory_space<vmem>>, vector<1x256xf32>
    %63 = vector.broadcast %62 : vector<1x256xf32> to vector<32x256xf32>
    %64 = arith.mulf %61, %63 : vector<32x256xf32>
    %c64 = arith.constant 64 : index
    %c0_42 = arith.constant 0 : index
    %65 = vector.load %arg10[%c64, %c0_42] : memref<288x256xf32, #tpu.memory_space<vmem>>, vector<32x256xf32>
    tpu.vector_store %arg10[%c64, %c0_42], %64 {strides = array<i32>} : memref<288x256xf32, #tpu.memory_space<vmem>>, vector<32x256xf32>,
    %c1_i32_43 = arith.constant 1 : i32
    %66 = tpu.dynamic_rotate %50 by %c1_i32_43 dim 1 : vector<32x256xf32>, i32 -> vector<32x256xf32>
    %c3_44 = arith.constant 3 : index
    %c0_45 = arith.constant 0 : index
    %67 = vector.load %arg2[%c3_44, %c0_45] : memref<9x256xf32, #tpu.memory_space<vmem>>, vector<1x256xf32>
    %68 = vector.broadcast %67 : vector<1x256xf32> to vector<32x256xf32>
    %69 = arith.mulf %66, %68 : vector<32x256xf32>
    %c96 = arith.constant 96 : index
    %c0_46 = arith.constant 0 : index
    %70 = vector.load %arg10[%c96, %c0_46] : memref<288x256xf32, #tpu.memory_space<vmem>>, vector<32x256xf32>
    tpu.vector_store %arg10[%c96, %c0_46], %69 {strides = array<i32>} : memref<288x256xf32, #tpu.memory_space<vmem>>, vector<32x256xf32>,
    %c128 = arith.constant 128 : index
    %c0_47 = arith.constant 0 : index
    %71 = vector.load %arg10[%c128, %c0_47] : memref<288x256xf32, #tpu.memory_space<vmem>>, vector<32x256xf32>
    tpu.vector_store %arg10[%c128, %c0_47], %50 {strides = array<i32>} : memref<288x256xf32, #tpu.memory_space<vmem>>, vector<32x256xf32>,
    %c255_i32_48 = arith.constant 255 : i32
    %72 = tpu.dynamic_rotate %50 by %c255_i32_48 dim 1 : vector<32x256xf32>, i32 -> vector<32x256xf32>
    %c5_49 = arith.constant 5 : index
    %c0_50 = arith.constant 0 : index
    %73 = vector.load %arg2[%c5_49, %c0_50] : memref<9x256xf32, #tpu.memory_space<vmem>>, vector<1x256xf32>
    %74 = vector.broadcast %73 : vector<1x256xf32> to vector<32x256xf32>
    %75 = arith.mulf %72, %74 : vector<32x256xf32>
    %c160 = arith.constant 160 : index
    %c0_51 = arith.constant 0 : index
    %76 = vector.load %arg10[%c160, %c0_51] : memref<288x256xf32, #tpu.memory_space<vmem>>, vector<32x256xf32>
    tpu.vector_store %arg10[%c160, %c0_51], %75 {strides = array<i32>} : memref<288x256xf32, #tpu.memory_space<vmem>>, vector<32x256xf32>,
    %c241_i32_52 = arith.constant 241 : i32
    %77 = tpu.dynamic_rotate %50 by %c241_i32_52 dim 1 : vector<32x256xf32>, i32 -> vector<32x256xf32>
    %c6_53 = arith.constant 6 : index
    %c0_54 = arith.constant 0 : index
    %78 = vector.load %arg2[%c6_53, %c0_54] : memref<9x256xf32, #tpu.memory_space<vmem>>, vector<1x256xf32>
    %79 = vector.broadcast %78 : vector<1x256xf32> to vector<32x256xf32>
    %80 = arith.mulf %77, %79 : vector<32x256xf32>
    %c192 = arith.constant 192 : index
    %c0_55 = arith.constant 0 : index
    %81 = vector.load %arg10[%c192, %c0_55] : memref<288x256xf32, #tpu.memory_space<vmem>>, vector<32x256xf32>
    tpu.vector_store %arg10[%c192, %c0_55], %80 {strides = array<i32>} : memref<288x256xf32, #tpu.memory_space<vmem>>, vector<32x256xf32>,
    %c240_i32_56 = arith.constant 240 : i32
    %82 = tpu.dynamic_rotate %50 by %c240_i32_56 dim 1 : vector<32x256xf32>, i32 -> vector<32x256xf32>
    %c7_57 = arith.constant 7 : index
    %c0_58 = arith.constant 0 : index
    %83 = vector.load %arg2[%c7_57, %c0_58] : memref<9x256xf32, #tpu.memory_space<vmem>>, vector<1x256xf32>
    %84 = vector.broadcast %83 : vector<1x256xf32> to vector<32x256xf32>
    %85 = arith.mulf %82, %84 : vector<32x256xf32>
    %c224 = arith.constant 224 : index
    %c0_59 = arith.constant 0 : index
    %86 = vector.load %arg10[%c224, %c0_59] : memref<288x256xf32, #tpu.memory_space<vmem>>, vector<32x256xf32>
    tpu.vector_store %arg10[%c224, %c0_59], %85 {strides = array<i32>} : memref<288x256xf32, #tpu.memory_space<vmem>>, vector<32x256xf32>,
    %c239_i32_60 = arith.constant 239 : i32
    %87 = tpu.dynamic_rotate %50 by %c239_i32_60 dim 1 : vector<32x256xf32>, i32 -> vector<32x256xf32>
    %c8_61 = arith.constant 8 : index
    %c0_62 = arith.constant 0 : index
    %88 = vector.load %arg2[%c8_61, %c0_62] : memref<9x256xf32, #tpu.memory_space<vmem>>, vector<1x256xf32>
    %89 = vector.broadcast %88 : vector<1x256xf32> to vector<32x256xf32>
    %90 = arith.mulf %87, %89 : vector<32x256xf32>
    %c256 = arith.constant 256 : index
    %c0_63 = arith.constant 0 : index
    %91 = vector.load %arg10[%c256, %c0_63] : memref<288x256xf32, #tpu.memory_space<vmem>>, vector<32x256xf32>
    tpu.vector_store %arg10[%c256, %c0_63], %90 {strides = array<i32>} : memref<288x256xf32, #tpu.memory_space<vmem>>, vector<32x256xf32>,
    %c0_64 = arith.constant 0 : index
    %c0_65 = arith.constant 0 : index
    %92 = vector.load %arg5[%c0_64, %c0_65] : memref<32x288xf32, #tpu.memory_space<vmem>>, vector<32x288xf32>
    %c0_66 = arith.constant 0 : index
    %c0_67 = arith.constant 0 : index
    %93 = vector.load %arg10[%c0_66, %c0_67] : memref<288x256xf32, #tpu.memory_space<vmem>>, vector<288x256xf32>
    %cst_68 = arith.constant dense<0.000000e+00> : vector<32x256xf32>
    %94 = tpu.matmul %92, %93, %cst_68 {dimension_numbers = #tpu.dot_dimension_numbers<[1], [0], [0], [1], [0, 0, 1, 1], [], []>} : vector<32x288xf32>, vector<288x256xf32>, vector<32x256xf32> -> vector<32x256xf32>
    %c0_69 = arith.constant 0 : index
    %c0_70 = arith.constant 0 : index
    %95 = vector.load %arg6[%c0_69, %c0_70] : memref<32x1xf32, #tpu.memory_space<vmem>>, vector<32x1xf32>
    %96 = vector.broadcast %95 : vector<32x1xf32> to vector<32x256xf32>
    %97 = arith.addf %94, %96 : vector<32x256xf32>
    %cst_71 = arith.constant 0.000000e+00 : f32
    %98 = vector.broadcast %cst_71 : f32 to vector<32x256xf32>
    %99 = arith.maximumf %97, %98 : vector<32x256xf32>
    %c17_i32_72 = arith.constant 17 : i32
    %100 = tpu.dynamic_rotate %99 by %c17_i32_72 dim 1 : vector<32x256xf32>, i32 -> vector<32x256xf32>
    %c0_73 = arith.constant 0 : index
    %c0_74 = arith.constant 0 : index
    %101 = vector.load %arg2[%c0_73, %c0_74] : memref<9x256xf32, #tpu.memory_space<vmem>>, vector<1x256xf32>
    %102 = vector.broadcast %101 : vector<1x256xf32> to vector<32x256xf32>
    %103 = arith.mulf %100, %102 : vector<32x256xf32>
    %c0_75 = arith.constant 0 : index
    %c0_76 = arith.constant 0 : index
    %104 = vector.load %arg10[%c0_75, %c0_76] : memref<288x256xf32, #tpu.memory_space<vmem>>, vector<32x256xf32>
    tpu.vector_store %arg10[%c0_75, %c0_76], %103 {strides = array<i32>} : memref<288x256xf32, #tpu.memory_space<vmem>>, vector<32x256xf32>,
    %c16_i32_77 = arith.constant 16 : i32
    %105 = tpu.dynamic_rotate %99 by %c16_i32_77 dim 1 : vector<32x256xf32>, i32 -> vector<32x256xf32>
    %c1_78 = arith.constant 1 : index
    %c0_79 = arith.constant 0 : index
    %106 = vector.load %arg2[%c1_78, %c0_79] : memref<9x256xf32, #tpu.memory_space<vmem>>, vector<1x256xf32>
    %107 = vector.broadcast %106 : vector<1x256xf32> to vector<32x256xf32>
    %108 = arith.mulf %105, %107 : vector<32x256xf32>
    %c32_80 = arith.constant 32 : index
    %c0_81 = arith.constant 0 : index
    %109 = vector.load %arg10[%c32_80, %c0_81] : memref<288x256xf32, #tpu.memory_space<vmem>>, vector<32x256xf32>
    tpu.vector_store %arg10[%c32_80, %c0_81], %108 {strides = array<i32>} : memref<288x256xf32, #tpu.memory_space<vmem>>, vector<32x256xf32>,
    %c15_i32_82 = arith.constant 15 : i32
    %110 = tpu.dynamic_rotate %99 by %c15_i32_82 dim 1 : vector<32x256xf32>, i32 -> vector<32x256xf32>
    %c2_83 = arith.constant 2 : index
    %c0_84 = arith.constant 0 : index
    %111 = vector.load %arg2[%c2_83, %c0_84] : memref<9x256xf32, #tpu.memory_space<vmem>>, vector<1x256xf32>
    %112 = vector.broadcast %111 : vector<1x256xf32> to vector<32x256xf32>
    %113 = arith.mulf %110, %112 : vector<32x256xf32>
    %c64_85 = arith.constant 64 : index
    %c0_86 = arith.constant 0 : index
    %114 = vector.load %arg10[%c64_85, %c0_86] : memref<288x256xf32, #tpu.memory_space<vmem>>, vector<32x256xf32>
    tpu.vector_store %arg10[%c64_85, %c0_86], %113 {strides = array<i32>} : memref<288x256xf32, #tpu.memory_space<vmem>>, vector<32x256xf32>,
    %c1_i32_87 = arith.constant 1 : i32
    %115 = tpu.dynamic_rotate %99 by %c1_i32_87 dim 1 : vector<32x256xf32>, i32 -> vector<32x256xf32>
    %c3_88 = arith.constant 3 : index
    %c0_89 = arith.constant 0 : index
    %116 = vector.load %arg2[%c3_88, %c0_89] : memref<9x256xf32, #tpu.memory_space<vmem>>, vector<1x256xf32>
    %117 = vector.broadcast %116 : vector<1x256xf32> to vector<32x256xf32>
    %118 = arith.mulf %115, %117 : vector<32x256xf32>
    %c96_90 = arith.constant 96 : index
    %c0_91 = arith.constant 0 : index
    %119 = vector.load %arg10[%c96_90, %c0_91] : memref<288x256xf32, #tpu.memory_space<vmem>>, vector<32x256xf32>
    tpu.vector_store %arg10[%c96_90, %c0_91], %118 {strides = array<i32>} : memref<288x256xf32, #tpu.memory_space<vmem>>, vector<32x256xf32>,
    %c128_92 = arith.constant 128 : index
    %c0_93 = arith.constant 0 : index
    %120 = vector.load %arg10[%c128_92, %c0_93] : memref<288x256xf32, #tpu.memory_space<vmem>>, vector<32x256xf32>
    tpu.vector_store %arg10[%c128_92, %c0_93], %99 {strides = array<i32>} : memref<288x256xf32, #tpu.memory_space<vmem>>, vector<32x256xf32>,
    %c255_i32_94 = arith.constant 255 : i32
    %121 = tpu.dynamic_rotate %99 by %c255_i32_94 dim 1 : vector<32x256xf32>, i32 -> vector<32x256xf32>
    %c5_95 = arith.constant 5 : index
    %c0_96 = arith.constant 0 : index
    %122 = vector.load %arg2[%c5_95, %c0_96] : memref<9x256xf32, #tpu.memory_space<vmem>>, vector<1x256xf32>
    %123 = vector.broadcast %122 : vector<1x256xf32> to vector<32x256xf32>
    %124 = arith.mulf %121, %123 : vector<32x256xf32>
    %c160_97 = arith.constant 160 : index
    %c0_98 = arith.constant 0 : index
    %125 = vector.load %arg10[%c160_97, %c0_98] : memref<288x256xf32, #tpu.memory_space<vmem>>, vector<32x256xf32>
    tpu.vector_store %arg10[%c160_97, %c0_98], %124 {strides = array<i32>} : memref<288x256xf32, #tpu.memory_space<vmem>>, vector<32x256xf32>,
    %c241_i32_99 = arith.constant 241 : i32
    %126 = tpu.dynamic_rotate %99 by %c241_i32_99 dim 1 : vector<32x256xf32>, i32 -> vector<32x256xf32>
    %c6_100 = arith.constant 6 : index
    %c0_101 = arith.constant 0 : index
    %127 = vector.load %arg2[%c6_100, %c0_101] : memref<9x256xf32, #tpu.memory_space<vmem>>, vector<1x256xf32>
    %128 = vector.broadcast %127 : vector<1x256xf32> to vector<32x256xf32>
    %129 = arith.mulf %126, %128 : vector<32x256xf32>
    %c192_102 = arith.constant 192 : index
    %c0_103 = arith.constant 0 : index
    %130 = vector.load %arg10[%c192_102, %c0_103] : memref<288x256xf32, #tpu.memory_space<vmem>>, vector<32x256xf32>
    tpu.vector_store %arg10[%c192_102, %c0_103], %129 {strides = array<i32>} : memref<288x256xf32, #tpu.memory_space<vmem>>, vector<32x256xf32>,
    %c240_i32_104 = arith.constant 240 : i32
    %131 = tpu.dynamic_rotate %99 by %c240_i32_104 dim 1 : vector<32x256xf32>, i32 -> vector<32x256xf32>
    %c7_105 = arith.constant 7 : index
    %c0_106 = arith.constant 0 : index
    %132 = vector.load %arg2[%c7_105, %c0_106] : memref<9x256xf32, #tpu.memory_space<vmem>>, vector<1x256xf32>
    %133 = vector.broadcast %132 : vector<1x256xf32> to vector<32x256xf32>
    %134 = arith.mulf %131, %133 : vector<32x256xf32>
    %c224_107 = arith.constant 224 : index
    %c0_108 = arith.constant 0 : index
    %135 = vector.load %arg10[%c224_107, %c0_108] : memref<288x256xf32, #tpu.memory_space<vmem>>, vector<32x256xf32>
    tpu.vector_store %arg10[%c224_107, %c0_108], %134 {strides = array<i32>} : memref<288x256xf32, #tpu.memory_space<vmem>>, vector<32x256xf32>,
    %c239_i32_109 = arith.constant 239 : i32
    %136 = tpu.dynamic_rotate %99 by %c239_i32_109 dim 1 : vector<32x256xf32>, i32 -> vector<32x256xf32>
    %c8_110 = arith.constant 8 : index
    %c0_111 = arith.constant 0 : index
    %137 = vector.load %arg2[%c8_110, %c0_111] : memref<9x256xf32, #tpu.memory_space<vmem>>, vector<1x256xf32>
    %138 = vector.broadcast %137 : vector<1x256xf32> to vector<32x256xf32>
    %139 = arith.mulf %136, %138 : vector<32x256xf32>
    %c256_112 = arith.constant 256 : index
    %c0_113 = arith.constant 0 : index
    %140 = vector.load %arg10[%c256_112, %c0_113] : memref<288x256xf32, #tpu.memory_space<vmem>>, vector<32x256xf32>
    tpu.vector_store %arg10[%c256_112, %c0_113], %139 {strides = array<i32>} : memref<288x256xf32, #tpu.memory_space<vmem>>, vector<32x256xf32>,
    %c0_114 = arith.constant 0 : index
    %c0_115 = arith.constant 0 : index
    %141 = vector.load %arg7[%c0_114, %c0_115] : memref<32x288xf32, #tpu.memory_space<vmem>>, vector<32x288xf32>
    %c0_116 = arith.constant 0 : index
    %c0_117 = arith.constant 0 : index
    %142 = vector.load %arg10[%c0_116, %c0_117] : memref<288x256xf32, #tpu.memory_space<vmem>>, vector<288x256xf32>
    %cst_118 = arith.constant dense<0.000000e+00> : vector<32x256xf32>
    %143 = tpu.matmul %141, %142, %cst_118 {dimension_numbers = #tpu.dot_dimension_numbers<[1], [0], [0], [1], [0, 0, 1, 1], [], []>} : vector<32x288xf32>, vector<288x256xf32>, vector<32x256xf32> -> vector<32x256xf32>
    %c0_119 = arith.constant 0 : index
    %c0_120 = arith.constant 0 : index
    %144 = vector.load %arg8[%c0_119, %c0_120] : memref<32x1xf32, #tpu.memory_space<vmem>>, vector<32x1xf32>
    %145 = vector.broadcast %144 : vector<32x1xf32> to vector<32x256xf32>
    %146 = arith.addf %143, %145 : vector<32x256xf32>
    %cst_121 = arith.constant 2.000000e+00 : f32
    %147 = vector.broadcast %cst_121 : f32 to vector<32x256xf32>
    %148 = arith.mulf %147, %50 : vector<32x256xf32>
    %149 = arith.addf %146, %148 : vector<32x256xf32>
    %c0_122 = arith.constant 0 : index
    %c0_123 = arith.constant 0 : index
    %c0_124 = arith.constant 0 : index
    %150 = vector.load %arg9[%c0_122, %c0_123, %c0_124] : memref<1x32x256xf32, #tpu.memory_space<vmem>>, vector<1x32x256xf32>
    %151 = vector.shape_cast %150 : vector<1x32x256xf32> to vector<32x256xf32>
    %152 = vector.shape_cast %149 : vector<32x256xf32> to vector<1x32x256xf32>
    tpu.vector_store %arg9[%c0_122, %c0_123, %c0_124], %152 {strides = array<i32>} : memref<1x32x256xf32, #tpu.memory_space<vmem>>, vector<1x32x256xf32>,
    return
  }
  func.func @transform_0(%arg0: i32) -> (i32, i32, i32) {
    %c0_i32 = arith.constant 0 : i32
    %c0_i32_0 = arith.constant 0 : i32
    %c0_i32_1 = arith.constant 0 : i32
    return %arg0, %c0_i32, %c0_i32_0 : i32, i32, i32
  }
  func.func @transform_1(%arg0: i32) -> (i32, i32) {
    %c0_i32 = arith.constant 0 : i32
    %c0_i32_0 = arith.constant 0 : i32
    %c0_i32_1 = arith.constant 0 : i32
    return %c0_i32, %c0_i32_0 : i32, i32
  }
  func.func @transform_2(%arg0: i32) -> (i32, i32) {
    %c0_i32 = arith.constant 0 : i32
    %c0_i32_0 = arith.constant 0 : i32
    %c0_i32_1 = arith.constant 0 : i32
    return %c0_i32, %c0_i32_0 : i32, i32
  }
  func.func @transform_3(%arg0: i32) -> (i32, i32) {
    %c0_i32 = arith.constant 0 : i32
    %c0_i32_0 = arith.constant 0 : i32
    %c0_i32_1 = arith.constant 0 : i32
    return %c0_i32, %c0_i32_0 : i32, i32
  }
  func.func @transform_4(%arg0: i32) -> (i32, i32) {
    %c0_i32 = arith.constant 0 : i32
    %c0_i32_0 = arith.constant 0 : i32
    %c0_i32_1 = arith.constant 0 : i32
    return %c0_i32, %c0_i32_0 : i32, i32
  }
  func.func @transform_5(%arg0: i32) -> (i32, i32) {
    %c0_i32 = arith.constant 0 : i32
    %c0_i32_0 = arith.constant 0 : i32
    %c0_i32_1 = arith.constant 0 : i32
    return %c0_i32, %c0_i32_0 : i32, i32
  }
  func.func @transform_6(%arg0: i32) -> (i32, i32) {
    %c0_i32 = arith.constant 0 : i32
    %c0_i32_0 = arith.constant 0 : i32
    %c0_i32_1 = arith.constant 0 : i32
    return %c0_i32, %c0_i32_0 : i32, i32
  }
  func.func @transform_7(%arg0: i32) -> (i32, i32) {
    %c0_i32 = arith.constant 0 : i32
    %c0_i32_0 = arith.constant 0 : i32
    %c0_i32_1 = arith.constant 0 : i32
    return %c0_i32, %c0_i32_0 : i32, i32
  }
  func.func @transform_8(%arg0: i32) -> (i32, i32, i32) {
    %c0_i32 = arith.constant 0 : i32
    %c0_i32_0 = arith.constant 0 : i32
    %c0_i32_1 = arith.constant 0 : i32
    return %arg0, %c0_i32, %c0_i32_0 : i32, i32, i32
  }
}

</mosaic_0001>

<llo_original>
// kernel: input_conv_forward.1
$region0: #{input_conv_forward.1}
  #allocation0 [shape = 'u32[]', space=smem, size = 0x4, offset = 0x4, fixed_abs, tag = 'smem constant byte address 0x4 - core index']
  #allocation1 [shape = 'u32[144,128]{1,0:T(1,128)}', space=vmem, size = 0x12000, scoped, tag = 'internal scratch']
  #allocation2 [shape = 'f32[288,256]{1,0:T(8,128)}', space=vmem, size = 0x48000, scoped, tag = 'scratch operand']
  %s0 = inlined_call_operand.vmem [shape: f32[2,4,256], index: 0, kind: input, shape index: {}]
  %s1 = inlined_call_operand.vmem [shape: f32[9,256], index: 1, kind: input, shape index: {}]
  %s2 = inlined_call_operand.vmem [shape: f32[32,36], index: 2, kind: input, shape index: {}]
  %s3 = inlined_call_operand.vmem [shape: f32[32,1], index: 3, kind: input, shape index: {}]
  %s4 = inlined_call_operand.vmem [shape: f32[32,288], index: 4, kind: input, shape index: {}]
  %s5 = inlined_call_operand.vmem [shape: f32[32,1], index: 5, kind: input, shape index: {}]
  %s6 = inlined_call_operand.vmem [shape: f32[32,288], index: 6, kind: input, shape index: {}]
  %s7 = inlined_call_operand.vmem [shape: f32[32,1], index: 7, kind: input, shape index: {}]
  %s8 = inlined_call_operand.vmem [shape: f32[2,32,256], index: 8, kind: output, shape index: {}]
  %s9 = sld [smem:[#allocation0]]
  $region65: #{input_conv_forward.1} parent=0
    _
  %s11 = ssub.s32 1, %s9
  %s12 = scalar_select 0, %s11, %s9
  loop: start=0, step=1, limit=4
  $region2: #{input_conv_forward.1} parent=0 // loop_pre_header
    _
  $region3: #{input_conv_forward.1} parent=0 // loop_header
    %s14 = sphi 0, %s18
    %p15 = scmp.ge.s32.totalorder %s14, 4
    %s24 = sphi 0, %s26
    %s27 = sphi 0, %s24
    %s28 = sphi 0, %s27
    %s44 = sphi 0, %s28
    %s48 = sphi 0, %s48
    %s50 = sphi 0, %s48
    %s51 = sphi 0, %s50
    %s65 = sphi 0, %s51
    %s69 = sphi 0, %s69
    %s71 = sphi 0, %s69
    %s72 = sphi 0, %s71
    %s86 = sphi 0, %s72
    %s90 = sphi 0, %s90
    %s92 = sphi 0, %s90
    %s93 = sphi 0, %s92
    %s107 = sphi 0, %s93
    %s111 = sphi 0, %s111
    %s113 = sphi 0, %s111
    %s114 = sphi 0, %s113
    %s128 = sphi 0, %s114
    %s132 = sphi 0, %s132
    %s134 = sphi 0, %s132
    %s135 = sphi 0, %s134
    %s149 = sphi 0, %s135
    %s153 = sphi 0, %s153
    %s155 = sphi 0, %s153
    %s156 = sphi 0, %s155
    %s170 = sphi 0, %s156
    %s174 = sphi 0, %s174
    %s176 = sphi 0, %s174
    %s177 = sphi 0, %s176
    %s191 = sphi 0, %s177
    %s197 = sphi 0, %s199
    %s200 = sphi 0, %s197
    %s201 = sphi 0, %s200
    %s217 = sphi 0, %s201
  $region4: #{input_conv_forward.1} parent=0 // loop_header_branch
    %17 = sbr.rel (%p15) target = $region8
  $region5: #{input_conv_forward.1} parent=0 // loop_body
    %s19 = ssub.s32 %s14, 1
    %s20 = ssub.s32 %s14, 2
    %s21 = sadd.s32 %s14, 1
    %s22 = ssub.s32 %s14, %s21
    %p23 = scmp.eq.s32.totalorder %s22, 0
    %s25 = sadd.s32 %s24, 1
    %s26 = scalar_select %p23, %s24, %s25
    %p29 = pneg %p23
    %p30 = scmp.eq.s32.totalorder %s14, 1
    %p31 = por %p29, %p30
    %p32 = scmp.ne.s32.totalorder %s24, %s27
    %p33 = scmp.eq.s32.totalorder %s14, 0
    %p34 = por %p32, %p33
    %p35 = scmp.ne.s32.totalorder %s24, %s27
    %p36 = scmp.eq.s32.totalorder %s19, 1
    %p37 = por %p35, %p36
    %p38 = scmp.ne.s32.totalorder %s27, %s28
    %p39 = scmp.eq.s32.totalorder %s19, 0
    %p40 = por %p38, %p39
    %p41 = scmp.ne.s32.totalorder %s27, %s28
    %p42 = scmp.eq.s32.totalorder %s20, 1
    %p43 = por %p41, %p42
    %p45 = scmp.ne.s32.totalorder %s28, %s44
    %p46 = scmp.eq.s32.totalorder %s20, 0
    %p47 = por %p45, %p46
    %s49 = sadd.s32 %s48, 1
    %p52 = scmp.eq.s32.totalorder %s14, 1
    %p53 = scmp.ne.s32.totalorder %s48, %s50
    %p54 = scmp.eq.s32.totalorder %s14, 0
    %p55 = por %p53, %p54
    %p56 = scmp.ne.s32.totalorder %s48, %s50
    %p57 = scmp.eq.s32.totalorder %s19, 1
    %p58 = por %p56, %p57
    %p59 = scmp.ne.s32.totalorder %s50, %s51
    %p60 = scmp.eq.s32.totalorder %s19, 0
    %p61 = por %p59, %p60
    %p62 = scmp.ne.s32.totalorder %s50, %s51
    %p63 = scmp.eq.s32.totalorder %s20, 1
    %p64 = por %p62, %p63
    %p66 = scmp.ne.s32.totalorder %s51, %s65
    %p67 = scmp.eq.s32.totalorder %s20, 0
    %p68 = por %p66, %p67
    %s70 = sadd.s32 %s69, 1
    %p73 = scmp.eq.s32.totalorder %s14, 1
    %p74 = scmp.ne.s32.totalorder %s69, %s71
    %p75 = scmp.eq.s32.totalorder %s14, 0
    %p76 = por %p74, %p75
    %p77 = scmp.ne.s32.totalorder %s69, %s71
    %p78 = scmp.eq.s32.totalorder %s19, 1
    %p79 = por %p77, %p78
    %p80 = scmp.ne.s32.totalorder %s71, %s72
    %p81 = scmp.eq.s32.totalorder %s19, 0
    %p82 = por %p80, %p81
    %p83 = scmp.ne.s32.totalorder %s71, %s72
    %p84 = scmp.eq.s32.totalorder %s20, 1
    %p85 = por %p83, %p84
    %p87 = scmp.ne.s32.totalorder %s72, %s86
    %p88 = scmp.eq.s32.totalorder %s20, 0
    %p89 = por %p87, %p88
    %s91 = sadd.s32 %s90, 1
    %p94 = scmp.eq.s32.totalorder %s14, 1
    %p95 = scmp.ne.s32.totalorder %s90, %s92
    %p96 = scmp.eq.s32.totalorder %s14, 0
    %p97 = por %p95, %p96
    %p98 = scmp.ne.s32.totalorder %s90, %s92
    %p99 = scmp.eq.s32.totalorder %s19, 1
    %p100 = por %p98, %p99
    %p101 = scmp.ne.s32.totalorder %s92, %s93
    %p102 = scmp.eq.s32.totalorder %s19, 0
    %p103 = por %p101, %p102
    %p104 = scmp.ne.s32.totalorder %s92, %s93
    %p105 = scmp.eq.s32.totalorder %s20, 1
    %p106 = por %p104, %p105
    %p108 = scmp.ne.s32.totalorder %s93, %s107
    %p109 = scmp.eq.s32.totalorder %s20, 0
    %p110 = por %p108, %p109
    %s112 = sadd.s32 %s111, 1
    %p115 = scmp.eq.s32.totalorder %s14, 1
    %p116 = scmp.ne.s32.totalorder %s111, %s113
    %p117 = scmp.eq.s32.totalorder %s14, 0
    %p118 = por %p116, %p117
    %p119 = scmp.ne.s32.totalorder %s111, %s113
    %p120 = scmp.eq.s32.totalorder %s19, 1
    %p121 = por %p119, %p120
    %p122 = scmp.ne.s32.totalorder %s113, %s114
    %p123 = scmp.eq.s32.totalorder %s19, 0
    %p124 = por %p122, %p123
    %p125 = scmp.ne.s32.totalorder %s113, %s114
    %p126 = scmp.eq.s32.totalorder %s20, 1
    %p127 = por %p125, %p126
    %p129 = scmp.ne.s32.totalorder %s114, %s128
    %p130 = scmp.eq.s32.totalorder %s20, 0
    %p131 = por %p129, %p130
    %s133 = sadd.s32 %s132, 1
    %p136 = scmp.eq.s32.totalorder %s14, 1
    %p137 = scmp.ne.s32.totalorder %s132, %s134
    %p138 = scmp.eq.s32.totalorder %s14, 0
    %p139 = por %p137, %p138
    %p140 = scmp.ne.s32.totalorder %s132, %s134
    %p141 = scmp.eq.s32.totalorder %s19, 1
    %p142 = por %p140, %p141
    %p143 = scmp.ne.s32.totalorder %s134, %s135
    %p144 = scmp.eq.s32.totalorder %s19, 0
    %p145 = por %p143, %p144
    %p146 = scmp.ne.s32.totalorder %s134, %s135
    %p147 = scmp.eq.s32.totalorder %s20, 1
    %p148 = por %p146, %p147
    %p150 = scmp.ne.s32.totalorder %s135, %s149
    %p151 = scmp.eq.s32.totalorder %s20, 0
    %p152 = por %p150, %p151
    %s154 = sadd.s32 %s153, 1
    %p157 = scmp.eq.s32.totalorder %s14, 1
    %p158 = scmp.ne.s32.totalorder %s153, %s155
    %p159 = scmp.eq.s32.totalorder %s14, 0
    %p160 = por %p158, %p159
    %p161 = scmp.ne.s32.totalorder %s153, %s155
    %p162 = scmp.eq.s32.totalorder %s19, 1
    %p163 = por %p161, %p162
    %p164 = scmp.ne.s32.totalorder %s155, %s156
    %p165 = scmp.eq.s32.totalorder %s19, 0
    %p166 = por %p164, %p165
    %p167 = scmp.ne.s32.totalorder %s155, %s156
    %p168 = scmp.eq.s32.totalorder %s20, 1
    %p169 = por %p167, %p168
    %p171 = scmp.ne.s32.totalorder %s156, %s170
    %p172 = scmp.eq.s32.totalorder %s20, 0
    %p173 = por %p171, %p172
    %s175 = sadd.s32 %s174, 1
    %p178 = scmp.eq.s32.totalorder %s14, 1
    %p179 = scmp.ne.s32.totalorder %s174, %s176
    %p180 = scmp.eq.s32.totalorder %s14, 0
    %p181 = por %p179, %p180
    %p182 = scmp.ne.s32.totalorder %s174, %s176
    %p183 = scmp.eq.s32.totalorder %s19, 1
    %p184 = por %p182, %p183
    %p185 = scmp.ne.s32.totalorder %s176, %s177
    %p186 = scmp.eq.s32.totalorder %s19, 0
    %p187 = por %p185, %p186
    %p188 = scmp.ne.s32.totalorder %s176, %s177
    %p189 = scmp.eq.s32.totalorder %s20, 1
    %p190 = por %p188, %p189
    %p192 = scmp.ne.s32.totalorder %s177, %s191
    %p193 = scmp.eq.s32.totalorder %s20, 0
    %p194 = por %p192, %p193
    %s195 = ssub.s32 %s14, %s21
    %p196 = scmp.eq.s32.totalorder %s195, 0
    %s198 = sadd.s32 %s197, 1
    %s199 = scalar_select %p196, %s197, %s198
    %p202 = pneg %p196
    %p203 = scmp.eq.s32.totalorder %s14, 1
    %p204 = por %p202, %p203
    %p205 = scmp.ne.s32.totalorder %s197, %s200
    %p206 = scmp.eq.s32.totalorder %s14, 0
    %p207 = por %p205, %p206
    %p208 = scmp.ne.s32.totalorder %s197, %s200
    %p209 = scmp.eq.s32.totalorder %s19, 1
    %p210 = por %p208, %p209
    %p211 = scmp.ne.s32.totalorder %s200, %s201
    %p212 = scmp.eq.s32.totalorder %s19, 0
    %p213 = por %p211, %p212
    %p214 = scmp.ne.s32.totalorder %s200, %s201
    %p215 = scmp.eq.s32.totalorder %s20, 1
    %p216 = por %p214, %p215
    %p218 = scmp.ne.s32.totalorder %s201, %s217
    %p219 = scmp.eq.s32.totalorder %s20, 0
    %p220 = por %p218, %p219
    %p221 = scmp.le.s32.totalorder 1, %s14
    %p222 = scmp.lt.s32.totalorder %s14, 3
    %p223 = pnand %p221, %p222
    %p224 = pneg %p223
    // Predicated region
    $region9: #{input_conv_forward.1} parent=5 // pred_check
      _
    $region10: #{input_conv_forward.1} parent=5 // pred_check_branch
      %226 = sbr.rel (%p223) target = $region12
    $region11: #{input_conv_forward.1} parent=5 // pred_region
      %s227 = ssub.s32 %s14, 1
      // Predicated region
      $region13: #{input_conv_forward.1} parent=11 // pred_check
        %p228 = pneg %p61
      $region14: #{input_conv_forward.1} parent=11 // pred_check_branch
        %230 = sbr.rel (%p228) target = $region16
      $region15: #{input_conv_forward.1} parent=11 // pred_region
        _
      $region16: #{input_conv_forward.1} parent=11 // pred_fallthru
        _
      // Predicated region
      $region17: #{input_conv_forward.1} parent=11 // pred_check
        %p231 = pneg %p82
      $region18: #{input_conv_forward.1} parent=11 // pred_check_branch
        %233 = sbr.rel (%p231) target = $region20
      $region19: #{input_conv_forward.1} parent=11 // pred_region
        _
      $region20: #{input_conv_forward.1} parent=11 // pred_fallthru
        _
      // Predicated region
      $region21: #{input_conv_forward.1} parent=11 // pred_check
        %p234 = pneg %p103
      $region22: #{input_conv_forward.1} parent=11 // pred_check_branch
        %236 = sbr.rel (%p234) target = $region24
      $region23: #{input_conv_forward.1} parent=11 // pred_region
        _
      $region24: #{input_conv_forward.1} parent=11 // pred_fallthru
        _
      // Predicated region
      $region25: #{input_conv_forward.1} parent=11 // pred_check
        %p237 = pneg %p124
      $region26: #{input_conv_forward.1} parent=11 // pred_check_branch
        %239 = sbr.rel (%p237) target = $region28
      $region27: #{input_conv_forward.1} parent=11 // pred_region
        _
      $region28: #{input_conv_forward.1} parent=11 // pred_fallthru
        _
      // Predicated region
      $region29: #{input_conv_forward.1} parent=11 // pred_check
        %p240 = pneg %p145
      $region30: #{input_conv_forward.1} parent=11 // pred_check_branch
        %242 = sbr.rel (%p240) target = $region32
      $region31: #{input_conv_forward.1} parent=11 // pred_region
        _
      $region32: #{input_conv_forward.1} parent=11 // pred_fallthru
        _
      // Predicated region
      $region33: #{input_conv_forward.1} parent=11 // pred_check
        %p243 = pneg %p166
      $region34: #{input_conv_forward.1} parent=11 // pred_check_branch
        %245 = sbr.rel (%p243) target = $region36
      $region35: #{input_conv_forward.1} parent=11 // pred_region
        _
      $region36: #{input_conv_forward.1} parent=11 // pred_fallthru
        _
      // Predicated region
      $region37: #{input_conv_forward.1} parent=11 // pred_check
        %p246 = pneg %p187
      $region38: #{input_conv_forward.1} parent=11 // pred_check_branch
        %248 = sbr.rel (%p246) target = $region40
      $region39: #{input_conv_forward.1} parent=11 // pred_region
        _
      $region40: #{input_conv_forward.1} parent=11 // pred_fallthru
        _
    $region12: #{input_conv_forward.1} parent=5 // pred_fallthru
      _
    %p249 = scmp.lt.s32.totalorder %s14, 2
    // Predicated region
    $region41: #{input_conv_forward.1} parent=5 // pred_check
      %p250 = pneg %p249
    $region42: #{input_conv_forward.1} parent=5 // pred_check_branch
      %252 = sbr.rel (%p250) target = $region44
    $region43: #{input_conv_forward.1} parent=5 // pred_region
      // Predicated region
      $region45: #{input_conv_forward.1} parent=43 // pred_check
        %p253 = pneg %p34
      $region46: #{input_conv_forward.1} parent=43 // pred_check_branch
        %255 = sbr.rel (%p253) target = $region48
      $region47: #{input_conv_forward.1} parent=43 // pred_region
        %p256 = scmp.lt.s32.totalorder %s14, 1
        %s257 = scalar_select %p256, %s14, 1
        %s258 = smul.addr %s257, 2
        %s259 = smul.addr %s258, 4
        %s260 = scalar_lea.vmem %s0, %s259
      $region48: #{input_conv_forward.1} parent=43 // pred_fallthru
        _
    $region44: #{input_conv_forward.1} parent=5 // pred_fallthru
      _
    %p261 = scmp.le.s32.totalorder 1, %s14
    %p262 = scmp.lt.s32.totalorder %s14, 3
    %p263 = pnand %p261, %p262
    %p264 = pneg %p263
    // Predicated region
    $region49: #{input_conv_forward.1} parent=5 // pred_check
      _
    $region50: #{input_conv_forward.1} parent=5 // pred_check_branch
      %266 = sbr.rel (%p263) target = $region52
    $region51: #{input_conv_forward.1} parent=5 // pred_region
      %s267 = ssub.s32 %s14, 1
      %p268 = scmp.lt.s32.totalorder %s19, 1
      %s269 = scalar_select %p268, %s19, 1
      %s270 = smul.addr %s269, 2
      %s271 = smul.addr %s270, 4
      %s272 = scalar_lea.vmem %s0, %s271
      %p273 = pneg %p40
      %p274 = pneg %p37
      %p275 = pneg %p61
      %p276 = pneg %p58
      %p277 = pneg %p82
      %p278 = pneg %p79
      %p279 = pneg %p103
      %p280 = pneg %p100
      %p281 = pneg %p124
      %p282 = pneg %p121
      %p283 = pneg %p145
      %p284 = pneg %p142
      %p285 = pneg %p166
      %p286 = pneg %p163
      %p287 = pneg %p187
      %p288 = pneg %p184
      %p289 = pneg %p213
      %p290 = pneg %p210
      %p291 = scmp.lt.s32.totalorder %s19, 1
      %s292 = scalar_select %p291, %s19, 1
      %s293 = smul.addr %s292, 8
      %s294 = smul.addr %s293, 8
      %s295 = scalar_lea.vmem %s8, %s294
      %p296 = scmp.lt.s32.totalorder %s19, 1
      %s297 = scalar_select %p296, %s19, 1
      %s298 = smul.addr %s297, 2
      %s299 = smul.addr %s298, 4
      %s300 = scalar_lea.vmem %s0, %s299
      %p301 = scmp.lt.s32.totalorder %s19, 1
      %s302 = scalar_select %p301, %s19, 1
      %s303 = smul.addr %s302, 8
      %s304 = smul.addr %s303, 8
      %s305 = scalar_lea.vmem %s8, %s304
      %v306 = vld [vmem:[%s300] sm:$0xff]
      %v308 = vcombine.high %v306, %v306
      %310 = vrot.lane.b32.xlu0 %v306, 17
      %v311 = vpop.permute.xlu0 %310
      %312 = vrot.lane.b32.xlu0 %v308, 17
      %v313 = vpop.permute.xlu0 %312
      %v314 = vlaneseq
      %v315 = vand.u32 %v314, 127
      %vm316 = vcmp.lt.s32.totalorder %v315, 17
      %v317 = vsel %vm316, %v311, %v313
      %v318 = vsel %vm316, %v313, %v311
      %v319 = vld [vmem:[%s1] ss:$8 sm:$0x3]
      %v321 = vlaneseq
      %v322 = vshrl.u32 %v321, 7
      %v323 = vsub.s32 0, %v322
      %v324 = vrot.slane %v319, %v323
      %v325 = vlaneseq
      %v326 = vshrl.u32 %v325, 7
      %v327 = vsub.s32 1, %v326
      %v328 = vrot.slane %v319, %v327
      %v331 = vmul.f32 %v318, %v324
      %v332 = vmul.f32 %v317, %v328
      %333 = vst [vmem:[#allocation2] sm:$0xf] %v331
      %334 = vst [vmem:[#allocation2 + $0x8] sm:$0xf] %v332
      %335 = vrot.lane.b32.xlu0 %v306, 16
      %v336 = vpop.permute.xlu0 %335
      %337 = vrot.lane.b32.xlu0 %v308, 16
      %v338 = vpop.permute.xlu0 %337
      %vm339 = vcmp.lt.s32.totalorder %v315, 16
      %v340 = vsel %vm339, %v336, %v338
      %v341 = vsel %vm339, %v338, %v336
      %s342 = scalar_lea.vmem %s1, 1
      %v343 = vld [vmem:[%s342] ss:$8 sm:$0x3]
      %v345 = vlaneseq
      %v346 = vshrl.u32 %v345, 7
      %v347 = vsub.s32 0, %v346
      %v348 = vrot.slane %v343, %v347
      %v349 = vlaneseq
      %v350 = vshrl.u32 %v349, 7
      %v351 = vsub.s32 1, %v350
      %v352 = vrot.slane %v343, %v351
      %v355 = vmul.f32 %v341, %v348
      %v356 = vmul.f32 %v340, %v352
      %v359 = vrot.slane %v355, 4
      %v360 = vrot.slane %v356, 4
      %363 = vst [vmem:[#allocation2] sm:$0xf0] %v359
      %364 = vst [vmem:[#allocation2 + $0x8] sm:$0xf0] %v360
      %365 = vrot.lane.b32.xlu0 %v306, 15
      %v366 = vpop.permute.xlu0 %365
      %367 = vrot.lane.b32.xlu0 %v308, 15
      %v368 = vpop.permute.xlu0 %367
      %vm369 = vcmp.lt.s32.totalorder %v315, 15
      %v370 = vsel %vm369, %v366, %v368
      %v371 = vsel %vm369, %v368, %v366
      %s372 = scalar_lea.vmem %s1, 2
      %v373 = vld [vmem:[%s372] ss:$8 sm:$0x3]
      %v375 = vlaneseq
      %v376 = vshrl.u32 %v375, 7
      %v377 = vsub.s32 0, %v376
      %v378 = vrot.slane %v373, %v377
      %v379 = vlaneseq
      %v380 = vshrl.u32 %v379, 7
      %v381 = vsub.s32 1, %v380
      %v382 = vrot.slane %v373, %v381
      %v385 = vmul.f32 %v371, %v378
      %v386 = vmul.f32 %v370, %v382
      %387 = vst [vmem:[#allocation2 + $0x10] sm:$0xf] %v385
      %388 = vst [vmem:[#allocation2 + $0x18] sm:$0xf] %v386
      %389 = vrot.lane.b32.xlu0 %v306, 1
      %v390 = vpop.permute.xlu0 %389
      %391 = vrot.lane.b32.xlu0 %v308, 1
      %v392 = vpop.permute.xlu0 %391
      %vm393 = vcmp.lt.s32.totalorder %v315, 1
      %v394 = vsel %vm393, %v390, %v392
      %v395 = vsel %vm393, %v392, %v390
      %s396 = scalar_lea.vmem %s1, 3
      %v397 = vld [vmem:[%s396] ss:$8 sm:$0x3]
      %v399 = vlaneseq
      %v400 = vshrl.u32 %v399, 7
      %v401 = vsub.s32 0, %v400
      %v402 = vrot.slane %v397, %v401
      %v403 = vlaneseq
      %v404 = vshrl.u32 %v403, 7
      %v405 = vsub.s32 1, %v404
      %v406 = vrot.slane %v397, %v405
      %v409 = vmul.f32 %v395, %v402
      %v410 = vmul.f32 %v394, %v406
      %v413 = vrot.slane %v409, 4
      %v414 = vrot.slane %v410, 4
      %417 = vst [vmem:[#allocation2 + $0x10] sm:$0xf0] %v413
      %418 = vst [vmem:[#allocation2 + $0x18] sm:$0xf0] %v414
      %419 = vst [vmem:[#allocation2 + $0x20] sm:$0xf] %v306
      %420 = vst [vmem:[#allocation2 + $0x28] sm:$0xf] %v308
      %421 = vrot.lane.b32.xlu0 %v306, 127
      %v422 = vpop.permute.xlu0 %421
      %423 = vrot.lane.b32.xlu0 %v308, 127
      %v424 = vpop.permute.xlu0 %423
      %vm425 = vcmp.lt.s32.totalorder %v315, 127
      %v426 = vsel %vm425, %v422, %v424
      %v427 = vsel %vm425, %v424, %v422
      %s428 = scalar_lea.vmem %s1, 5
      %v429 = vld [vmem:[%s428] ss:$8 sm:$0x3]
      %v431 = vlaneseq
      %v432 = vshrl.u32 %v431, 7
      %v433 = vsub.s32 0, %v432
      %v434 = vrot.slane %v429, %v433
      %v435 = vlaneseq
      %v436 = vshrl.u32 %v435, 7
      %v437 = vsub.s32 1, %v436
      %v438 = vrot.slane %v429, %v437
      %v441 = vmul.f32 %v426, %v434
      %v442 = vmul.f32 %v427, %v438
      %v445 = vrot.slane %v441, 4
      %v446 = vrot.slane %v442, 4
      %449 = vst [vmem:[#allocation2 + $0x20] sm:$0xf0] %v445
      %450 = vst [vmem:[#allocation2 + $0x28] sm:$0xf0] %v446
      %451 = vrot.lane.b32.xlu0 %v306, 113
      %v452 = vpop.permute.xlu0 %451
      %453 = vrot.lane.b32.xlu0 %v308, 113
      %v454 = vpop.permute.xlu0 %453
      %vm455 = vcmp.lt.s32.totalorder %v315, 113
      %v456 = vsel %vm455, %v452, %v454
      %v457 = vsel %vm455, %v454, %v452
      %s458 = scalar_lea.vmem %s1, 6
      %v459 = vld [vmem:[%s458] ss:$8 sm:$0x3]
      %v461 = vlaneseq
      %v462 = vshrl.u32 %v461, 7
      %v463 = vsub.s32 0, %v462
      %v464 = vrot.slane %v459, %v463
      %v465 = vlaneseq
      %v466 = vshrl.u32 %v465, 7
      %v467 = vsub.s32 1, %v466
      %v468 = vrot.slane %v459, %v467
      %v471 = vmul.f32 %v456, %v464
      %v472 = vmul.f32 %v457, %v468
      %473 = vst [vmem:[#allocation2 + $0x30] sm:$0xf] %v471
      %474 = vst [vmem:[#allocation2 + $0x38] sm:$0xf] %v472
      %475 = vrot.lane.b32.xlu0 %v306, 112
      %v476 = vpop.permute.xlu0 %475
      %477 = vrot.lane.b32.xlu0 %v308, 112
      %v478 = vpop.permute.xlu0 %477
      %vm479 = vcmp.lt.s32.totalorder %v315, 112
      %v480 = vsel %vm479, %v476, %v478
      %v481 = vsel %vm479, %v478, %v476
      %s482 = scalar_lea.vmem %s1, 7
      %v483 = vld [vmem:[%s482] ss:$8 sm:$0x3]
      %v485 = vlaneseq
      %v486 = vshrl.u32 %v485, 7
      %v487 = vsub.s32 0, %v486
      %v488 = vrot.slane %v483, %v487
      %v489 = vlaneseq
      %v490 = vshrl.u32 %v489, 7
      %v491 = vsub.s32 1, %v490
      %v492 = vrot.slane %v483, %v491
      %v495 = vmul.f32 %v480, %v488
      %v496 = vmul.f32 %v481, %v492
      %v499 = vrot.slane %v495, 4
      %v500 = vrot.slane %v496, 4
      %503 = vst [vmem:[#allocation2 + $0x30] sm:$0xf0] %v499
      %504 = vst [vmem:[#allocation2 + $0x38] sm:$0xf0] %v500
      %505 = vrot.lane.b32.xlu0 %v306, 111
      %v506 = vpop.permute.xlu0 %505
      %507 = vrot.lane.b32.xlu0 %v308, 111
      %v508 = vpop.permute.xlu0 %507
      %vm509 = vcmp.lt.s32.totalorder %v315, 111
      %v510 = vsel %vm509, %v506, %v508
      %v511 = vsel %vm509, %v508, %v506
      %s512 = scalar_lea.vmem %s1, 16
      %v513 = vld [vmem:[%s512] ss:$8 sm:$0x3]
      %v515 = vlaneseq
      %v516 = vshrl.u32 %v515, 7
      %v517 = vsub.s32 0, %v516
      %v518 = vrot.slane %v513, %v517
      %v519 = vlaneseq
      %v520 = vshrl.u32 %v519, 7
      %v521 = vsub.s32 1, %v520
      %v522 = vrot.slane %v513, %v521
      %v525 = vmul.f32 %v510, %v518
      %v526 = vmul.f32 %v511, %v522
      %527 = vst [vmem:[#allocation2 + $0x40] sm:$0xf] %v525
      %528 = vst [vmem:[#allocation2 + $0x48] sm:$0xf] %v526
      %v529 = vld [vmem:[%s2] sm:$0xff]
      %v530 = vld [vmem:[%s2 + $0x8] sm:$0xff]
      %v531 = vld [vmem:[%s2 + $0x10] sm:$0xff]
      %v532 = vld [vmem:[%s2 + $0x18] sm:$0xff]
      %v533 = vld [vmem:[#allocation2] sm:$0xff]
      %v534 = vld [vmem:[#allocation2 + $0x8] sm:$0xff]
      %v535 = vld [vmem:[#allocation2 + $0x10] sm:$0xff]
      %v536 = vld [vmem:[#allocation2 + $0x18] sm:$0xff]
      %v537 = vld [vmem:[#allocation2 + $0x20] sm:$0xff]
      %v538 = vld [vmem:[#allocation2 + $0x28] sm:$0xff]
      %v539 = vld [vmem:[#allocation2 + $0x30] sm:$0xff]
      %v540 = vld [vmem:[#allocation2 + $0x38] sm:$0xff]
      %v541 = vld [vmem:[#allocation2 + $0x40] sm:$0xf]
      %v542 = vld [vmem:[#allocation2 + $0x48] sm:$0xf]
      %v543 = vld [vmem:[%s3] sm:$0xff]
      %v544 = vld [vmem:[%s3 + $0x8] sm:$0xff]
      %v545 = vld [vmem:[%s3 + $0x10] sm:$0xff]
      %v546 = vld [vmem:[%s3 + $0x18] sm:$0xff]
      %548 = vset.pattern.permute.xlu0 0
      %549 = vperm.xlu0 %548, %v543
      %v550 = vpop.permute.xlu0 %549
      %553 = vset.pattern.permute.xlu0 0
      %554 = vperm.xlu0 %553, %v544
      %v555 = vpop.permute.xlu0 %554
      %558 = vset.pattern.permute.xlu0 0
      %559 = vperm.xlu0 %558, %v545
      %v560 = vpop.permute.xlu0 %559
      %563 = vset.pattern.permute.xlu0 0
      %564 = vperm.xlu0 %563, %v546
      %v565 = vpop.permute.xlu0 %564
      %vm567 = vcmask 293888
      %v569 = vsel %vm567, %v529, 0
      %v572 = vsel %vm567, %v530, 0
      %v575 = vsel %vm567, %v531, 0
      %v578 = vsel %vm567, %v532, 0
      %vm580 = vcmask 1043456
      %v582 = vsel %vm580, %v541, 0
      %v585 = vsel %vm580, %v542, 0
      %587 = vmatprep.subr.mxu0 %v534
      %588 = vmatpush1.msra.mxu0 %v533
      %589 = vmatprep.subr.mxu0 %v536
      %590 = vmatpush1.msra.mxu0 %v535
      %591 = vmatprep.subr.mxu0 %v538
      %592 = vmatpush1.msra.mxu0 %v537
      %593 = vmatprep.subr.mxu0 %v540
      %594 = vmatpush1.msra.mxu0 %v539
      %595 = vmatprep.subr.mxu0 %v585
      %596 = vmatpush1.msra.mxu0 %v582
      %597 = vmatprep.subr.mxu0 0.0
      %598 = vmatpush1.msra.mxu0 0.0
      %599 = vmatprep.subr.mxu0 0.0
      %600 = vmatpush1.msra.mxu0 0.0
      %601 = vmatprep.subr.mxu0 0.0
      %602 = vmatpush1.msra.mxu0 0.0
      %603 = vmatprep.subr.mxu0 0.0
      %604 = vmatpush1.msra.mxu0 0.0
      %605 = vmatprep.subr.mxu0 0.0
      %606 = vmatpush1.msra.mxu0 0.0
      %607 = vmatprep.subr.mxu0 0.0
      %608 = vmatpush1.msra.mxu0 0.0
      %609 = vmatprep.subr.mxu0 0.0
      %610 = vmatpush1.msra.mxu0 0.0
      %611 = vmatprep.subr.mxu0 0.0
      %612 = vmatpush1.msra.mxu0 0.0
      %613 = vmatprep.subr.mxu0 0.0
      %614 = vmatpush1.msra.mxu0 0.0
      %615 = vmatprep.subr.mxu0 0.0
      %616 = vmatpush1.msra.mxu0 0.0
      %617 = vmatprep.subr.mxu0 0.0
      %618 = vmatpush1.msra.mxu0 0.0
      %619 = vmatprep.subr.mxu0 0.0
      %620 = vmatpush1.msra.mxu0 0.0
      %621 = vmatprep.subr.mxu0 0.0
      %622 = vmatpush1.msra.mxu0 0.0
      %623 = vmatprep.subr.mxu0 0.0
      %624 = vmatpush1.msra.mxu0 0.0
      %625 = vmatprep.subr.mxu0 0.0
      %626 = vmatpush1.msra.mxu0 0.0
      %627 = vmatprep.subr.mxu0 0.0
      %628 = vmatpush1.msra.mxu0 0.0
      %629 = vmatprep.subr.mxu0 0.0
      %630 = vmatpush1.msra.mxu0 0.0
      %631 = vmatprep.subr.mxu0 0.0
      %632 = vmatpush1.msra.mxu0 0.0
      %633 = vmatprep.subr.mxu0 0.0
      %634 = vmatpush1.msra.mxu0 0.0
      %635 = vmatprep.subr.mxu0 0.0
      %636 = vmatpush1.msra.mxu0 0.0
      %637 = vmatprep.subr.mxu0 0.0
      %638 = vmatpush1.msra.mxu0 0.0
      %639 = vmatprep.subr.mxu0 0.0
      %640 = vmatpush1.msra.mxu0 0.0
      %641 = vmatprep.subr.mxu0 0.0
      %642 = vmatpush1.msra.mxu0 0.0
      %643 = vmatprep.subr.mxu0 0.0
      %644 = vmatpush1.msra.mxu0 0.0
      %645 = vmatprep.subr.mxu0 0.0
      %646 = vmatpush1.msra.mxu0 0.0
      %647 = vmatprep.subr.mxu0 0.0
      %648 = vmatpush1.msra.mxu0 0.0
      %649 = vmatprep.subr.mxu0 0.0
      %650 = vmatpush1.msra.mxu0 0.0
      %651 = vmatprep.mubr.f32.mxu0 0.0
      %652 = vmatmul.mubr.f32.gmra.mrb[0].mxu0 %v569
      %v653 = vpop.f32.mrb[0].mxu0
      %v654 = vadd.f32 %v550, %v653
      %v655 = vpop.f32.mrb[0].mxu0
      %v656 = vadd.f32 %v550, %v655
      %657 = vmatprep.mubr.f32.mxu0 0.0
      %658 = vmatmul.mubr.f32.gmra.mrb[0].mxu0 %v572
      %v659 = vpop.f32.mrb[0].mxu0
      %v660 = vadd.f32 %v555, %v659
      %v661 = vpop.f32.mrb[0].mxu0
      %v662 = vadd.f32 %v555, %v661
      %663 = vmatprep.mubr.f32.mxu0 0.0
      %664 = vmatmul.mubr.f32.gmra.mrb[0].mxu0 %v575
      %v665 = vpop.f32.mrb[0].mxu0
      %v666 = vadd.f32 %v560, %v665
      %v667 = vpop.f32.mrb[0].mxu0
      %v668 = vadd.f32 %v560, %v667
      %669 = vmatprep.mubr.f32.mxu0 0.0
      %670 = vmatmul.mubr.f32.gmra.mrb[0].mxu0 %v578
      %v671 = vpop.f32.mrb[0].mxu0
      %v672 = vadd.f32 %v565, %v671
      %v673 = vpop.f32.mrb[0].mxu0
      %v674 = vadd.f32 %v565, %v673
      %675 = vdwg.mxu0
      %v676 = vmax.f32 %v654, 0.0
      %v677 = vmax.f32 %v656, 0.0
      %v678 = vmax.f32 %v660, 0.0
      %v679 = vmax.f32 %v662, 0.0
      %v680 = vmax.f32 %v666, 0.0
      %v681 = vmax.f32 %v668, 0.0
      %v682 = vmax.f32 %v672, 0.0
      %v683 = vmax.f32 %v674, 0.0
      %684 = vrot.lane.b32.xlu0 %v676, 17
      %v685 = vpop.permute.xlu0 %684
      %686 = vrot.lane.b32.xlu0 %v678, 17
      %v687 = vpop.permute.xlu0 %686
      %688 = vrot.lane.b32.xlu0 %v680, 17
      %v689 = vpop.permute.xlu0 %688
      %690 = vrot.lane.b32.xlu0 %v682, 17
      %v691 = vpop.permute.xlu0 %690
      %692 = vrot.lane.b32.xlu0 %v677, 17
      %v693 = vpop.permute.xlu0 %692
      %694 = vrot.lane.b32.xlu0 %v679, 17
      %v695 = vpop.permute.xlu0 %694
      %696 = vrot.lane.b32.xlu0 %v681, 17
      %v697 = vpop.permute.xlu0 %696
      %698 = vrot.lane.b32.xlu0 %v683, 17
      %v699 = vpop.permute.xlu0 %698
      %v700 = vsel %vm316, %v685, %v693
      %v701 = vsel %vm316, %v687, %v695
      %v702 = vsel %vm316, %v689, %v697
      %v703 = vsel %vm316, %v691, %v699
      %v704 = vsel %vm316, %v693, %v685
      %v705 = vsel %vm316, %v695, %v687
      %v706 = vsel %vm316, %v697, %v689
      %v707 = vsel %vm316, %v699, %v691
      %v708 = vld [vmem:[%s1] ss:$8 sm:$0x3]
      %v710 = vlaneseq
      %v711 = vshrl.u32 %v710, 7
      %v712 = vsub.s32 0, %v711
      %v713 = vrot.slane %v708, %v712
      %v714 = vlaneseq
      %v715 = vshrl.u32 %v714, 7
      %v716 = vsub.s32 1, %v715
      %v717 = vrot.slane %v708, %v716
      %v720 = vmul.f32 %v704, %v713
      %v721 = vmul.f32 %v700, %v717
      %v722 = vmul.f32 %v705, %v713
      %v723 = vmul.f32 %v701, %v717
      %v724 = vmul.f32 %v706, %v713
      %v725 = vmul.f32 %v702, %v717
      %v726 = vmul.f32 %v707, %v713
      %v727 = vmul.f32 %v703, %v717
      %728 = vst [vmem:[#allocation2] sm:$0xff] %v720
      %729 = vst [vmem:[#allocation2 + $0x8] sm:$0xff] %v721
      %730 = vst [vmem:[#allocation2 + $0x10] sm:$0xff] %v722
      %731 = vst [vmem:[#allocation2 + $0x18] sm:$0xff] %v723
      %732 = vst [vmem:[#allocation2 + $0x20] sm:$0xff] %v724
      %733 = vst [vmem:[#allocation2 + $0x28] sm:$0xff] %v725
      %734 = vst [vmem:[#allocation2 + $0x30] sm:$0xff] %v726
      %735 = vst [vmem:[#allocation2 + $0x38] sm:$0xff] %v727
      %736 = vrot.lane.b32.xlu0 %v676, 16
      %v737 = vpop.permute.xlu0 %736
      %738 = vrot.lane.b32.xlu0 %v678, 16
      %v739 = vpop.permute.xlu0 %738
      %740 = vrot.lane.b32.xlu0 %v680, 16
      %v741 = vpop.permute.xlu0 %740
      %742 = vrot.lane.b32.xlu0 %v682, 16
      %v743 = vpop.permute.xlu0 %742
      %744 = vrot.lane.b32.xlu0 %v677, 16
      %v745 = vpop.permute.xlu0 %744
      %746 = vrot.lane.b32.xlu0 %v679, 16
      %v747 = vpop.permute.xlu0 %746
      %748 = vrot.lane.b32.xlu0 %v681, 16
      %v749 = vpop.permute.xlu0 %748
      %750 = vrot.lane.b32.xlu0 %v683, 16
      %v751 = vpop.permute.xlu0 %750
      %v752 = vsel %vm339, %v737, %v745
      %v753 = vsel %vm339, %v739, %v747
      %v754 = vsel %vm339, %v741, %v749
      %v755 = vsel %vm339, %v743, %v751
      %v756 = vsel %vm339, %v745, %v737
      %v757 = vsel %vm339, %v747, %v739
      %v758 = vsel %vm339, %v749, %v741
      %v759 = vsel %vm339, %v751, %v743
      %v760 = vld [vmem:[%s342] ss:$8 sm:$0x3]
      %v762 = vlaneseq
      %v763 = vshrl.u32 %v762, 7
      %v764 = vsub.s32 0, %v763
      %v765 = vrot.slane %v760, %v764
      %v766 = vlaneseq
      %v767 = vshrl.u32 %v766, 7
      %v768 = vsub.s32 1, %v767
      %v769 = vrot.slane %v760, %v768
      %v772 = vmul.f32 %v756, %v765
      %v773 = vmul.f32 %v752, %v769
      %v774 = vmul.f32 %v757, %v765
      %v775 = vmul.f32 %v753, %v769
      %v776 = vmul.f32 %v758, %v765
      %v777 = vmul.f32 %v754, %v769
      %v778 = vmul.f32 %v759, %v765
      %v779 = vmul.f32 %v755, %v769
      %780 = vst [vmem:[#allocation2 + $0x40] sm:$0xff] %v772
      %781 = vst [vmem:[#allocation2 + $0x48] sm:$0xff] %v773
      %782 = vst [vmem:[#allocation2 + $0x50] sm:$0xff] %v774
      %783 = vst [vmem:[#allocation2 + $0x58] sm:$0xff] %v775
      %784 = vst [vmem:[#allocation2 + $0x60] sm:$0xff] %v776
      %785 = vst [vmem:[#allocation2 + $0x68] sm:$0xff] %v777
      %786 = vst [vmem:[#allocation2 + $0x70] sm:$0xff] %v778
      %787 = vst [vmem:[#allocation2 + $0x78] sm:$0xff] %v779
      %788 = vrot.lane.b32.xlu0 %v676, 15
      %v789 = vpop.permute.xlu0 %788
      %790 = vrot.lane.b32.xlu0 %v678, 15
      %v791 = vpop.permute.xlu0 %790
      %792 = vrot.lane.b32.xlu0 %v680, 15
      %v793 = vpop.permute.xlu0 %792
      %794 = vrot.lane.b32.xlu0 %v682, 15
      %v795 = vpop.permute.xlu0 %794
      %796 = vrot.lane.b32.xlu0 %v677, 15
      %v797 = vpop.permute.xlu0 %796
      %798 = vrot.lane.b32.xlu0 %v679, 15
      %v799 = vpop.permute.xlu0 %798
      %800 = vrot.lane.b32.xlu0 %v681, 15
      %v801 = vpop.permute.xlu0 %800
      %802 = vrot.lane.b32.xlu0 %v683, 15
      %v803 = vpop.permute.xlu0 %802
      %v804 = vsel %vm369, %v789, %v797
      %v805 = vsel %vm369, %v791, %v799
      %v806 = vsel %vm369, %v793, %v801
      %v807 = vsel %vm369, %v795, %v803
      %v808 = vsel %vm369, %v797, %v789
      %v809 = vsel %vm369, %v799, %v791
      %v810 = vsel %vm369, %v801, %v793
      %v811 = vsel %vm369, %v803, %v795
      %v812 = vld [vmem:[%s372] ss:$8 sm:$0x3]
      %v814 = vlaneseq
      %v815 = vshrl.u32 %v814, 7
      %v816 = vsub.s32 0, %v815
      %v817 = vrot.slane %v812, %v816
      %v818 = vlaneseq
      %v819 = vshrl.u32 %v818, 7
      %v820 = vsub.s32 1, %v819
      %v821 = vrot.slane %v812, %v820
      %v824 = vmul.f32 %v808, %v817
      %v825 = vmul.f32 %v804, %v821
      %v826 = vmul.f32 %v809, %v817
      %v827 = vmul.f32 %v805, %v821
      %v828 = vmul.f32 %v810, %v817
      %v829 = vmul.f32 %v806, %v821
      %v830 = vmul.f32 %v811, %v817
      %v831 = vmul.f32 %v807, %v821
      %832 = vst [vmem:[#allocation2 + $0x80] sm:$0xff] %v824
      %833 = vst [vmem:[#allocation2 + $0x88] sm:$0xff] %v825
      %834 = vst [vmem:[#allocation2 + $0x90] sm:$0xff] %v826
      %835 = vst [vmem:[#allocation2 + $0x98] sm:$0xff] %v827
      %836 = vst [vmem:[#allocation2 + $0xa0] sm:$0xff] %v828
      %837 = vst [vmem:[#allocation2 + $0xa8] sm:$0xff] %v829
      %838 = vst [vmem:[#allocation2 + $0xb0] sm:$0xff] %v830
      %839 = vst [vmem:[#allocation2 + $0xb8] sm:$0xff] %v831
      %840 = vrot.lane.b32.xlu0 %v676, 1
      %v841 = vpop.permute.xlu0 %840
      %842 = vrot.lane.b32.xlu0 %v678, 1
      %v843 = vpop.permute.xlu0 %842
      %844 = vrot.lane.b32.xlu0 %v680, 1
      %v845 = vpop.permute.xlu0 %844
      %846 = vrot.lane.b32.xlu0 %v682, 1
      %v847 = vpop.permute.xlu0 %846
      %848 = vrot.lane.b32.xlu0 %v677, 1
      %v849 = vpop.permute.xlu0 %848
      %850 = vrot.lane.b32.xlu0 %v679, 1
      %v851 = vpop.permute.xlu0 %850
      %852 = vrot.lane.b32.xlu0 %v681, 1
      %v853 = vpop.permute.xlu0 %852
      %854 = vrot.lane.b32.xlu0 %v683, 1
      %v855 = vpop.permute.xlu0 %854
      %v856 = vsel %vm393, %v841, %v849
      %v857 = vsel %vm393, %v843, %v851
      %v858 = vsel %vm393, %v845, %v853
      %v859 = vsel %vm393, %v847, %v855
      %v860 = vsel %vm393, %v849, %v841
      %v861 = vsel %vm393, %v851, %v843
      %v862 = vsel %vm393, %v853, %v845
      %v863 = vsel %vm393, %v855, %v847
      %v864 = vld [vmem:[%s396] ss:$8 sm:$0x3]
      %v866 = vlaneseq
      %v867 = vshrl.u32 %v866, 7
      %v868 = vsub.s32 0, %v867
      %v869 = vrot.slane %v864, %v868
      %v870 = vlaneseq
      %v871 = vshrl.u32 %v870, 7
      %v872 = vsub.s32 1, %v871
      %v873 = vrot.slane %v864, %v872
      %v876 = vmul.f32 %v860, %v869
      %v877 = vmul.f32 %v856, %v873
      %v878 = vmul.f32 %v861, %v869
      %v879 = vmul.f32 %v857, %v873
      %v880 = vmul.f32 %v862, %v869
      %v881 = vmul.f32 %v858, %v873
      %v882 = vmul.f32 %v863, %v869
      %v883 = vmul.f32 %v859, %v873
      %884 = vst [vmem:[#allocation2 + $0xc0] sm:$0xff] %v876
      %885 = vst [vmem:[#allocation2 + $0xc8] sm:$0xff] %v877
      %886 = vst [vmem:[#allocation2 + $0xd0] sm:$0xff] %v878
      %887 = vst [vmem:[#allocation2 + $0xd8] sm:$0xff] %v879
      %888 = vst [vmem:[#allocation2 + $0xe0] sm:$0xff] %v880
      %889 = vst [vmem:[#allocation2 + $0xe8] sm:$0xff] %v881
      %890 = vst [vmem:[#allocation2 + $0xf0] sm:$0xff] %v882
      %891 = vst [vmem:[#allocation2 + $0xf8] sm:$0xff] %v883
      %892 = vst [vmem:[#allocation2 + $0x100] sm:$0xff] %v676
      %893 = vst [vmem:[#allocation2 + $0x108] sm:$0xff] %v677
      %894 = vst [vmem:[#allocation2 + $0x110] sm:$0xff] %v678
      %895 = vst [vmem:[#allocation2 + $0x118] sm:$0xff] %v679
      %896 = vst [vmem:[#allocation2 + $0x120] sm:$0xff] %v680
      %897 = vst [vmem:[#allocation2 + $0x128] sm:$0xff] %v681
      %898 = vst [vmem:[#allocation2 + $0x130] sm:$0xff] %v682
      %899 = vst [vmem:[#allocation2 + $0x138] sm:$0xff] %v683
      %900 = vrot.lane.b32.xlu0 %v676, 127
      %v901 = vpop.permute.xlu0 %900
      %902 = vrot.lane.b32.xlu0 %v678, 127
      %v903 = vpop.permute.xlu0 %902
      %904 = vrot.lane.b32.xlu0 %v680, 127
      %v905 = vpop.permute.xlu0 %904
      %906 = vrot.lane.b32.xlu0 %v682, 127
      %v907 = vpop.permute.xlu0 %906
      %908 = vrot.lane.b32.xlu0 %v677, 127
      %v909 = vpop.permute.xlu0 %908
      %910 = vrot.lane.b32.xlu0 %v679, 127
      %v911 = vpop.permute.xlu0 %910
      %912 = vrot.lane.b32.xlu0 %v681, 127
      %v913 = vpop.permute.xlu0 %912
      %914 = vrot.lane.b32.xlu0 %v683, 127
      %v915 = vpop.permute.xlu0 %914
      %v916 = vsel %vm425, %v901, %v909
      %v917 = vsel %vm425, %v903, %v911
      %v918 = vsel %vm425, %v905, %v913
      %v919 = vsel %vm425, %v907, %v915
      %v920 = vsel %vm425, %v909, %v901
      %v921 = vsel %vm425, %v911, %v903
      %v922 = vsel %vm425, %v913, %v905
      %v923 = vsel %vm425, %v915, %v907
      %v924 = vld [vmem:[%s428] ss:$8 sm:$0x3]
      %v926 = vlaneseq
      %v927 = vshrl.u32 %v926, 7
      %v928 = vsub.s32 0, %v927
      %v929 = vrot.slane %v924, %v928
      %v930 = vlaneseq
      %v931 = vshrl.u32 %v930, 7
      %v932 = vsub.s32 1, %v931
      %v933 = vrot.slane %v924, %v932
      %v936 = vmul.f32 %v916, %v929
      %v937 = vmul.f32 %v920, %v933
      %v938 = vmul.f32 %v917, %v929
      %v939 = vmul.f32 %v921, %v933
      %v940 = vmul.f32 %v918, %v929
      %v941 = vmul.f32 %v922, %v933
      %v942 = vmul.f32 %v919, %v929
      %v943 = vmul.f32 %v923, %v933
      %944 = vst [vmem:[#allocation2 + $0x140] sm:$0xff] %v936
      %945 = vst [vmem:[#allocation2 + $0x148] sm:$0xff] %v937
      %946 = vst [vmem:[#allocation2 + $0x150] sm:$0xff] %v938
      %947 = vst [vmem:[#allocation2 + $0x158] sm:$0xff] %v939
      %948 = vst [vmem:[#allocation2 + $0x160] sm:$0xff] %v940
      %949 = vst [vmem:[#allocation2 + $0x168] sm:$0xff] %v941
      %950 = vst [vmem:[#allocation2 + $0x170] sm:$0xff] %v942
      %951 = vst [vmem:[#allocation2 + $0x178] sm:$0xff] %v943
      %952 = vrot.lane.b32.xlu0 %v676, 113
      %v953 = vpop.permute.xlu0 %952
      %954 = vrot.lane.b32.xlu0 %v678, 113
      %v955 = vpop.permute.xlu0 %954
      %956 = vrot.lane.b32.xlu0 %v680, 113
      %v957 = vpop.permute.xlu0 %956
      %958 = vrot.lane.b32.xlu0 %v682, 113
      %v959 = vpop.permute.xlu0 %958
      %960 = vrot.lane.b32.xlu0 %v677, 113
      %v961 = vpop.permute.xlu0 %960
      %962 = vrot.lane.b32.xlu0 %v679, 113
      %v963 = vpop.permute.xlu0 %962
      %964 = vrot.lane.b32.xlu0 %v681, 113
      %v965 = vpop.permute.xlu0 %964
      %966 = vrot.lane.b32.xlu0 %v683, 113
      %v967 = vpop.permute.xlu0 %966
      %v968 = vsel %vm455, %v953, %v961
      %v969 = vsel %vm455, %v955, %v963
      %v970 = vsel %vm455, %v957, %v965
      %v971 = vsel %vm455, %v959, %v967
      %v972 = vsel %vm455, %v961, %v953
      %v973 = vsel %vm455, %v963, %v955
      %v974 = vsel %vm455, %v965, %v957
      %v975 = vsel %vm455, %v967, %v959
      %v976 = vld [vmem:[%s458] ss:$8 sm:$0x3]
      %v978 = vlaneseq
      %v979 = vshrl.u32 %v978, 7
      %v980 = vsub.s32 0, %v979
      %v981 = vrot.slane %v976, %v980
      %v982 = vlaneseq
      %v983 = vshrl.u32 %v982, 7
      %v984 = vsub.s32 1, %v983
      %v985 = vrot.slane %v976, %v984
      %v988 = vmul.f32 %v968, %v981
      %v989 = vmul.f32 %v972, %v985
      %v990 = vmul.f32 %v969, %v981
      %v991 = vmul.f32 %v973, %v985
      %v992 = vmul.f32 %v970, %v981
      %v993 = vmul.f32 %v974, %v985
      %v994 = vmul.f32 %v971, %v981
      %v995 = vmul.f32 %v975, %v985
      %996 = vst [vmem:[#allocation2 + $0x180] sm:$0xff] %v988
      %997 = vst [vmem:[#allocation2 + $0x188] sm:$0xff] %v989
      %998 = vst [vmem:[#allocation2 + $0x190] sm:$0xff] %v990
      %999 = vst [vmem:[#allocation2 + $0x198] sm:$0xff] %v991
      %1000 = vst [vmem:[#allocation2 + $0x1a0] sm:$0xff] %v992
      %1001 = vst [vmem:[#allocation2 + $0x1a8] sm:$0xff] %v993
      %1002 = vst [vmem:[#allocation2 + $0x1b0] sm:$0xff] %v994
      %1003 = vst [vmem:[#allocation2 + $0x1b8] sm:$0xff] %v995
      %1004 = vrot.lane.b32.xlu0 %v676, 112
      %v1005 = vpop.permute.xlu0 %1004
      %1006 = vrot.lane.b32.xlu0 %v678, 112
      %v1007 = vpop.permute.xlu0 %1006
      %1008 = vrot.lane.b32.xlu0 %v680, 112
      %v1009 = vpop.permute.xlu0 %1008
      %1010 = vrot.lane.b32.xlu0 %v682, 112
      %v1011 = vpop.permute.xlu0 %1010
      %1012 = vrot.lane.b32.xlu0 %v677, 112
      %v1013 = vpop.permute.xlu0 %1012
      %1014 = vrot.lane.b32.xlu0 %v679, 112
      %v1015 = vpop.permute.xlu0 %1014
      %1016 = vrot.lane.b32.xlu0 %v681, 112
      %v1017 = vpop.permute.xlu0 %1016
      %1018 = vrot.lane.b32.xlu0 %v683, 112
      %v1019 = vpop.permute.xlu0 %1018
      %v1020 = vsel %vm479, %v1005, %v1013
      %v1021 = vsel %vm479, %v1007, %v1015
      %v1022 = vsel %vm479, %v1009, %v1017
      %v1023 = vsel %vm479, %v1011, %v1019
      %v1024 = vsel %vm479, %v1013, %v1005
      %v1025 = vsel %vm479, %v1015, %v1007
      %v1026 = vsel %vm479, %v1017, %v1009
      %v1027 = vsel %vm479, %v1019, %v1011
      %v1028 = vld [vmem:[%s482] ss:$8 sm:$0x3]
      %v1030 = vlaneseq
      %v1031 = vshrl.u32 %v1030, 7
      %v1032 = vsub.s32 0, %v1031
      %v1033 = vrot.slane %v1028, %v1032
      %v1034 = vlaneseq
      %v1035 = vshrl.u32 %v1034, 7
      %v1036 = vsub.s32 1, %v1035
      %v1037 = vrot.slane %v1028, %v1036
      %v1040 = vmul.f32 %v1020, %v1033
      %v1041 = vmul.f32 %v1024, %v1037
      %v1042 = vmul.f32 %v1021, %v1033
      %v1043 = vmul.f32 %v1025, %v1037
      %v1044 = vmul.f32 %v1022, %v1033
      %v1045 = vmul.f32 %v1026, %v1037
      %v1046 = vmul.f32 %v1023, %v1033
      %v1047 = vmul.f32 %v1027, %v1037
      %1048 = vst [vmem:[#allocation2 + $0x1c0] sm:$0xff] %v1040
      %1049 = vst [vmem:[#allocation2 + $0x1c8] sm:$0xff] %v1041
      %1050 = vst [vmem:[#allocation2 + $0x1d0] sm:$0xff] %v1042
      %1051 = vst [vmem:[#allocation2 + $0x1d8] sm:$0xff] %v1043
      %1052 = vst [vmem:[#allocation2 + $0x1e0] sm:$0xff] %v1044
      %1053 = vst [vmem:[#allocation2 + $0x1e8] sm:$0xff] %v1045
      %1054 = vst [vmem:[#allocation2 + $0x1f0] sm:$0xff] %v1046
      %1055 = vst [vmem:[#allocation2 + $0x1f8] sm:$0xff] %v1047
      %1056 = vrot.lane.b32.xlu0 %v676, 111
      %v1057 = vpop.permute.xlu0 %1056
      %1058 = vrot.lane.b32.xlu0 %v678, 111
      %v1059 = vpop.permute.xlu0 %1058
      %1060 = vrot.lane.b32.xlu0 %v680, 111
      %v1061 = vpop.permute.xlu0 %1060
      %1062 = vrot.lane.b32.xlu0 %v682, 111
      %v1063 = vpop.permute.xlu0 %1062
      %1064 = vrot.lane.b32.xlu0 %v677, 111
      %v1065 = vpop.permute.xlu0 %1064
      %1066 = vrot.lane.b32.xlu0 %v679, 111
      %v1067 = vpop.permute.xlu0 %1066
      %1068 = vrot.lane.b32.xlu0 %v681, 111
      %v1069 = vpop.permute.xlu0 %1068
      %1070 = vrot.lane.b32.xlu0 %v683, 111
      %v1071 = vpop.permute.xlu0 %1070
      %v1072 = vsel %vm509, %v1057, %v1065
      %v1073 = vsel %vm509, %v1059, %v1067
      %v1074 = vsel %vm509, %v1061, %v1069
      %v1075 = vsel %vm509, %v1063, %v1071
      %v1076 = vsel %vm509, %v1065, %v1057
      %v1077 = vsel %vm509, %v1067, %v1059
      %v1078 = vsel %vm509, %v1069, %v1061
      %v1079 = vsel %vm509, %v1071, %v1063
      %v1080 = vld [vmem:[%s512] ss:$8 sm:$0x3]
      %v1082 = vlaneseq
      %v1083 = vshrl.u32 %v1082, 7
      %v1084 = vsub.s32 0, %v1083
      %v1085 = vrot.slane %v1080, %v1084
      %v1086 = vlaneseq
      %v1087 = vshrl.u32 %v1086, 7
      %v1088 = vsub.s32 1, %v1087
      %v1089 = vrot.slane %v1080, %v1088
      %v1092 = vmul.f32 %v1072, %v1085
      %v1093 = vmul.f32 %v1076, %v1089
      %v1094 = vmul.f32 %v1073, %v1085
      %v1095 = vmul.f32 %v1077, %v1089
      %v1096 = vmul.f32 %v1074, %v1085
      %v1097 = vmul.f32 %v1078, %v1089
      %v1098 = vmul.f32 %v1075, %v1085
      %v1099 = vmul.f32 %v1079, %v1089
      %1100 = vst [vmem:[#allocation2 + $0x200] sm:$0xff] %v1092
      %1101 = vst [vmem:[#allocation2 + $0x208] sm:$0xff] %v1093
      %1102 = vst [vmem:[#allocation2 + $0x210] sm:$0xff] %v1094
      %1103 = vst [vmem:[#allocation2 + $0x218] sm:$0xff] %v1095
      %1104 = vst [vmem:[#allocation2 + $0x220] sm:$0xff] %v1096
      %1105 = vst [vmem:[#allocation2 + $0x228] sm:$0xff] %v1097
      %1106 = vst [vmem:[#allocation2 + $0x230] sm:$0xff] %v1098
      %1107 = vst [vmem:[#allocation2 + $0x238] sm:$0xff] %v1099
      %v1108 = vld [vmem:[%s4] sm:$0xff]
      %v1109 = vld [vmem:[%s4 + $0x8] sm:$0xff]
      %v1110 = vld [vmem:[%s4 + $0x10] sm:$0xff]
      %v1111 = vld [vmem:[%s4 + $0x18] sm:$0xff]
      %v1112 = vld [vmem:[%s4 + $0x20] sm:$0xff]
      %v1113 = vld [vmem:[%s4 + $0x28] sm:$0xff]
      %v1114 = vld [vmem:[%s4 + $0x30] sm:$0xff]
      %v1115 = vld [vmem:[%s4 + $0x38] sm:$0xff]
      %v1116 = vld [vmem:[%s4 + $0x40] sm:$0xff]
      %v1117 = vld [vmem:[%s4 + $0x48] sm:$0xff]
      %v1118 = vld [vmem:[%s4 + $0x50] sm:$0xff]
      %v1119 = vld [vmem:[%s4 + $0x58] sm:$0xff]
      %v1120 = vld [vmem:[#allocation2] sm:$0xff]
      %v1121 = vld [vmem:[#allocation2 + $0x8] sm:$0xff]
      %v1122 = vld [vmem:[#allocation2 + $0x10] sm:$0xff]
      %v1123 = vld [vmem:[#allocation2 + $0x18] sm:$0xff]
      %v1124 = vld [vmem:[#allocation2 + $0x20] sm:$0xff]
      %v1125 = vld [vmem:[#allocation2 + $0x28] sm:$0xff]
      %v1126 = vld [vmem:[#allocation2 + $0x30] sm:$0xff]
      %v1127 = vld [vmem:[#allocation2 + $0x38] sm:$0xff]
      %v1128 = vld [vmem:[#allocation2 + $0x40] sm:$0xff]
      %v1129 = vld [vmem:[#allocation2 + $0x48] sm:$0xff]
      %v1130 = vld [vmem:[#allocation2 + $0x50] sm:$0xff]
      %v1131 = vld [vmem:[#allocation2 + $0x58] sm:$0xff]
      %v1132 = vld [vmem:[#allocation2 + $0x60] sm:$0xff]
      %v1133 = vld [vmem:[#allocation2 + $0x68] sm:$0xff]
      %v1134 = vld [vmem:[#allocation2 + $0x70] sm:$0xff]
      %v1135 = vld [vmem:[#allocation2 + $0x78] sm:$0xff]
      %v1136 = vld [vmem:[#allocation2 + $0x80] sm:$0xff]
      %v1137 = vld [vmem:[#allocation2 + $0x88] sm:$0xff]
      %v1138 = vld [vmem:[#allocation2 + $0x90] sm:$0xff]
      %v1139 = vld [vmem:[#allocation2 + $0x98] sm:$0xff]
      %v1140 = vld [vmem:[#allocation2 + $0xa0] sm:$0xff]
      %v1141 = vld [vmem:[#allocation2 + $0xa8] sm:$0xff]
      %v1142 = vld [vmem:[#allocation2 + $0xb0] sm:$0xff]
      %v1143 = vld [vmem:[#allocation2 + $0xb8] sm:$0xff]
      %v1144 = vld [vmem:[#allocation2 + $0xc0] sm:$0xff]
      %v1145 = vld [vmem:[#allocation2 + $0xc8] sm:$0xff]
      %v1146 = vld [vmem:[#allocation2 + $0xd0] sm:$0xff]
      %v1147 = vld [vmem:[#allocation2 + $0xd8] sm:$0xff]
      %v1148 = vld [vmem:[#allocation2 + $0xe0] sm:$0xff]
      %v1149 = vld [vmem:[#allocation2 + $0xe8] sm:$0xff]
      %v1150 = vld [vmem:[#allocation2 + $0xf0] sm:$0xff]
      %v1151 = vld [vmem:[#allocation2 + $0xf8] sm:$0xff]
      %v1152 = vld [vmem:[#allocation2 + $0x100] sm:$0xff]
      %v1153 = vld [vmem:[#allocation2 + $0x108] sm:$0xff]
      %v1154 = vld [vmem:[#allocation2 + $0x110] sm:$0xff]
      %v1155 = vld [vmem:[#allocation2 + $0x118] sm:$0xff]
      %v1156 = vld [vmem:[#allocation2 + $0x120] sm:$0xff]
      %v1157 = vld [vmem:[#allocation2 + $0x128] sm:$0xff]
      %v1158 = vld [vmem:[#allocation2 + $0x130] sm:$0xff]
      %v1159 = vld [vmem:[#allocation2 + $0x138] sm:$0xff]
      %v1160 = vld [vmem:[#allocation2 + $0x140] sm:$0xff]
      %v1161 = vld [vmem:[#allocation2 + $0x148] sm:$0xff]
      %v1162 = vld [vmem:[#allocation2 + $0x150] sm:$0xff]
      %v1163 = vld [vmem:[#allocation2 + $0x158] sm:$0xff]
      %v1164 = vld [vmem:[#allocation2 + $0x160] sm:$0xff]
      %v1165 = vld [vmem:[#allocation2 + $0x168] sm:$0xff]
      %v1166 = vld [vmem:[#allocation2 + $0x170] sm:$0xff]
      %v1167 = vld [vmem:[#allocation2 + $0x178] sm:$0xff]
      %v1168 = vld [vmem:[#allocation2 + $0x180] sm:$0xff]
      %v1169 = vld [vmem:[#allocation2 + $0x188] sm:$0xff]
      %v1170 = vld [vmem:[#allocation2 + $0x190] sm:$0xff]
      %v1171 = vld [vmem:[#allocation2 + $0x198] sm:$0xff]
      %v1172 = vld [vmem:[#allocation2 + $0x1a0] sm:$0xff]
      %v1173 = vld [vmem:[#allocation2 + $0x1a8] sm:$0xff]
      %v1174 = vld [vmem:[#allocation2 + $0x1b0] sm:$0xff]
      %v1175 = vld [vmem:[#allocation2 + $0x1b8] sm:$0xff]
      %v1176 = vld [vmem:[#allocation2 + $0x1c0] sm:$0xff]
      %v1177 = vld [vmem:[#allocation2 + $0x1c8] sm:$0xff]
      %v1178 = vld [vmem:[#allocation2 + $0x1d0] sm:$0xff]
      %v1179 = vld [vmem:[#allocation2 + $0x1d8] sm:$0xff]
      %v1180 = vld [vmem:[#allocation2 + $0x1e0] sm:$0xff]
      %v1181 = vld [vmem:[#allocation2 + $0x1e8] sm:$0xff]
      %v1182 = vld [vmem:[#allocation2 + $0x1f0] sm:$0xff]
      %v1183 = vld [vmem:[#allocation2 + $0x1f8] sm:$0xff]
      %v1184 = vld [vmem:[#allocation2 + $0x200] sm:$0xff]
      %v1185 = vld [vmem:[#allocation2 + $0x208] sm:$0xff]
      %v1186 = vld [vmem:[#allocation2 + $0x210] sm:$0xff]
      %v1187 = vld [vmem:[#allocation2 + $0x218] sm:$0xff]
      %v1188 = vld [vmem:[#allocation2 + $0x220] sm:$0xff]
      %v1189 = vld [vmem:[#allocation2 + $0x228] sm:$0xff]
      %v1190 = vld [vmem:[#allocation2 + $0x230] sm:$0xff]
      %v1191 = vld [vmem:[#allocation2 + $0x238] sm:$0xff]
      %v1192 = vld [vmem:[%s5] sm:$0xff]
      %v1193 = vld [vmem:[%s5 + $0x8] sm:$0xff]
      %v1194 = vld [vmem:[%s5 + $0x10] sm:$0xff]
      %v1195 = vld [vmem:[%s5 + $0x18] sm:$0xff]
      %1197 = vset.pattern.permute.xlu0 0
      %1198 = vperm.xlu0 %1197, %v1192
      %v1199 = vpop.permute.xlu0 %1198
      %1202 = vset.pattern.permute.xlu0 0
      %1203 = vperm.xlu0 %1202, %v1193
      %v1204 = vpop.permute.xlu0 %1203
      %1207 = vset.pattern.permute.xlu0 0
      %1208 = vperm.xlu0 %1207, %v1194
      %v1209 = vpop.permute.xlu0 %1208
      %1212 = vset.pattern.permute.xlu0 0
      %1213 = vperm.xlu0 %1212, %v1195
      %v1214 = vpop.permute.xlu0 %1213
      %vm1216 = vcmask 261120
      %v1218 = vsel %vm1216, %v1110, 0
      %v1221 = vsel %vm1216, %v1113, 0
      %v1224 = vsel %vm1216, %v1116, 0
      %v1227 = vsel %vm1216, %v1119, 0
      %1229 = vmatprep.subr.mxu0 %v1121
      %1230 = vmatpush1.msra.mxu0 %v1120
      %1231 = vmatprep.subr.mxu0 %v1123
      %1232 = vmatpush1.msra.mxu0 %v1122
      %1233 = vmatprep.subr.mxu0 %v1125
      %1234 = vmatpush1.msra.mxu0 %v1124
      %1235 = vmatprep.subr.mxu0 %v1127
      %1236 = vmatpush1.msra.mxu0 %v1126
      %1237 = vmatprep.subr.mxu0 %v1129
      %1238 = vmatpush1.msra.mxu0 %v1128
      %1239 = vmatprep.subr.mxu0 %v1131
      %1240 = vmatpush1.msra.mxu0 %v1130
      %1241 = vmatprep.subr.mxu0 %v1133
      %1242 = vmatpush1.msra.mxu0 %v1132
      %1243 = vmatprep.subr.mxu0 %v1135
      %1244 = vmatpush1.msra.mxu0 %v1134
      %1245 = vmatprep.subr.mxu0 %v1137
      %1246 = vmatpush1.msra.mxu0 %v1136
      %1247 = vmatprep.subr.mxu0 %v1139
      %1248 = vmatpush1.msra.mxu0 %v1138
      %1249 = vmatprep.subr.mxu0 %v1141
      %1250 = vmatpush1.msra.mxu0 %v1140
      %1251 = vmatprep.subr.mxu0 %v1143
      %1252 = vmatpush1.msra.mxu0 %v1142
      %1253 = vmatprep.subr.mxu0 %v1145
      %1254 = vmatpush1.msra.mxu0 %v1144
      %1255 = vmatprep.subr.mxu0 %v1147
      %1256 = vmatpush1.msra.mxu0 %v1146
      %1257 = vmatprep.subr.mxu0 %v1149
      %1258 = vmatpush1.msra.mxu0 %v1148
      %1259 = vmatprep.subr.mxu0 %v1151
      %1260 = vmatpush1.msra.mxu0 %v1150
      %1261 = vmatprep.subr.mxu0 %v1153
      %1262 = vmatpush1.msra.mxu0 %v1152
      %1263 = vmatprep.subr.mxu0 %v1155
      %1264 = vmatpush1.msra.mxu0 %v1154
      %1265 = vmatprep.subr.mxu0 %v1157
      %1266 = vmatpush1.msra.mxu0 %v1156
      %1267 = vmatprep.subr.mxu0 %v1159
      %1268 = vmatpush1.msra.mxu0 %v1158
      %1269 = vmatprep.subr.mxu0 %v1161
      %1270 = vmatpush1.msra.mxu0 %v1160
      %1271 = vmatprep.subr.mxu0 %v1163
      %1272 = vmatpush1.msra.mxu0 %v1162
      %1273 = vmatprep.subr.mxu0 %v1165
      %1274 = vmatpush1.msra.mxu0 %v1164
      %1275 = vmatprep.subr.mxu0 %v1167
      %1276 = vmatpush1.msra.mxu0 %v1166
      %1277 = vmatprep.subr.mxu0 %v1169
      %1278 = vmatpush1.msra.mxu0 %v1168
      %1279 = vmatprep.subr.mxu0 %v1171
      %1280 = vmatpush1.msra.mxu0 %v1170
      %1281 = vmatprep.subr.mxu0 %v1173
      %1282 = vmatpush1.msra.mxu0 %v1172
      %1283 = vmatprep.subr.mxu0 %v1175
      %1284 = vmatpush1.msra.mxu0 %v1174
      %1285 = vmatprep.subr.mxu0 %v1177
      %1286 = vmatpush1.msra.mxu0 %v1176
      %1287 = vmatprep.subr.mxu0 %v1179
      %1288 = vmatpush1.msra.mxu0 %v1178
      %1289 = vmatprep.subr.mxu0 %v1181
      %1290 = vmatpush1.msra.mxu0 %v1180
      %1291 = vmatprep.subr.mxu0 %v1183
      %1292 = vmatpush1.msra.mxu0 %v1182
      %1293 = vmatprep.mubr.f32.mxu0 %v1109
      %1294 = vmatmul.mubr.f32.gmra.mrb[0].mxu0 %v1108
      %v1295 = vpop.f32.mrb[0].mxu0
      %v1296 = vadd.f32 %v1199, %v1295
      %v1297 = vpop.f32.mrb[0].mxu0
      %v1298 = vadd.f32 %v1199, %v1297
      %1299 = vmatprep.mubr.f32.mxu0 %v1112
      %1300 = vmatmul.mubr.f32.gmra.mrb[0].mxu0 %v1111
      %v1301 = vpop.f32.mrb[0].mxu0
      %v1302 = vadd.f32 %v1204, %v1301
      %v1303 = vpop.f32.mrb[0].mxu0
      %v1304 = vadd.f32 %v1204, %v1303
      %1305 = vmatprep.mubr.f32.mxu0 %v1115
      %1306 = vmatmul.mubr.f32.gmra.mrb[0].mxu0 %v1114
      %v1307 = vpop.f32.mrb[0].mxu0
      %v1308 = vadd.f32 %v1209, %v1307
      %v1309 = vpop.f32.mrb[0].mxu0
      %v1310 = vadd.f32 %v1209, %v1309
      %1311 = vmatprep.mubr.f32.mxu0 %v1118
      %1312 = vmatmul.mubr.f32.gmra.mrb[0].mxu0 %v1117
      %v1313 = vpop.f32.mrb[0].mxu0
      %v1314 = vadd.f32 %v1214, %v1313
      %v1315 = vpop.f32.mrb[0].mxu0
      %v1316 = vadd.f32 %v1214, %v1315
      %1317 = vdwg.mxu0
      %1318 = vmatprep.subr.mxu0 %v1185
      %1319 = vmatpush1.msra.mxu0 %v1184
      %1320 = vmatprep.subr.mxu0 %v1187
      %1321 = vmatpush1.msra.mxu0 %v1186
      %1322 = vmatprep.subr.mxu0 %v1189
      %1323 = vmatpush1.msra.mxu0 %v1188
      %1324 = vmatprep.subr.mxu0 %v1191
      %1325 = vmatpush1.msra.mxu0 %v1190
      %1326 = vmatprep.subr.mxu0 0.0
      %1327 = vmatpush1.msra.mxu0 0.0
      %1328 = vmatprep.subr.mxu0 0.0
      %1329 = vmatpush1.msra.mxu0 0.0
      %1330 = vmatprep.subr.mxu0 0.0
      %1331 = vmatpush1.msra.mxu0 0.0
      %1332 = vmatprep.subr.mxu0 0.0
      %1333 = vmatpush1.msra.mxu0 0.0
      %1334 = vmatprep.subr.mxu0 0.0
      %1335 = vmatpush1.msra.mxu0 0.0
      %1336 = vmatprep.subr.mxu0 0.0
      %1337 = vmatpush1.msra.mxu0 0.0
      %1338 = vmatprep.subr.mxu0 0.0
      %1339 = vmatpush1.msra.mxu0 0.0
      %1340 = vmatprep.subr.mxu0 0.0
      %1341 = vmatpush1.msra.mxu0 0.0
      %1342 = vmatprep.subr.mxu0 0.0
      %1343 = vmatpush1.msra.mxu0 0.0
      %1344 = vmatprep.subr.mxu0 0.0
      %1345 = vmatpush1.msra.mxu0 0.0
      %1346 = vmatprep.subr.mxu0 0.0
      %1347 = vmatpush1.msra.mxu0 0.0
      %1348 = vmatprep.subr.mxu0 0.0
      %1349 = vmatpush1.msra.mxu0 0.0
      %1350 = vmatprep.subr.mxu0 0.0
      %1351 = vmatpush1.msra.mxu0 0.0
      %1352 = vmatprep.subr.mxu0 0.0
      %1353 = vmatpush1.msra.mxu0 0.0
      %1354 = vmatprep.subr.mxu0 0.0
      %1355 = vmatpush1.msra.mxu0 0.0
      %1356 = vmatprep.subr.mxu0 0.0
      %1357 = vmatpush1.msra.mxu0 0.0
      %1358 = vmatprep.subr.mxu0 0.0
      %1359 = vmatpush1.msra.mxu0 0.0
      %1360 = vmatprep.subr.mxu0 0.0
      %1361 = vmatpush1.msra.mxu0 0.0
      %1362 = vmatprep.subr.mxu0 0.0
      %1363 = vmatpush1.msra.mxu0 0.0
      %1364 = vmatprep.subr.mxu0 0.0
      %1365 = vmatpush1.msra.mxu0 0.0
      %1366 = vmatprep.subr.mxu0 0.0
      %1367 = vmatpush1.msra.mxu0 0.0
      %1368 = vmatprep.subr.mxu0 0.0
      %1369 = vmatpush1.msra.mxu0 0.0
      %1370 = vmatprep.subr.mxu0 0.0
      %1371 = vmatpush1.msra.mxu0 0.0
      %1372 = vmatprep.subr.mxu0 0.0
      %1373 = vmatpush1.msra.mxu0 0.0
      %1374 = vmatprep.subr.mxu0 0.0
      %1375 = vmatpush1.msra.mxu0 0.0
      %1376 = vmatprep.subr.mxu0 0.0
      %1377 = vmatpush1.msra.mxu0 0.0
      %1378 = vmatprep.subr.mxu0 0.0
      %1379 = vmatpush1.msra.mxu0 0.0
      %1380 = vmatprep.subr.mxu0 0.0
      %1381 = vmatpush1.msra.mxu0 0.0
      %1382 = vmatprep.mubr.f32.mxu0 0.0
      %1383 = vmatmul.mubr.f32.gmra.mrb[0].mxu0 %v1218
      %v1384 = vpop.f32.mrb[0].mxu0
      %v1385 = vadd.f32 %v1296, %v1384
      %v1386 = vpop.f32.mrb[0].mxu0
      %v1387 = vadd.f32 %v1298, %v1386
      %1388 = vmatprep.mubr.f32.mxu0 0.0
      %1389 = vmatmul.mubr.f32.gmra.mrb[0].mxu0 %v1221
      %v1390 = vpop.f32.mrb[0].mxu0
      %v1391 = vadd.f32 %v1302, %v1390
      %v1392 = vpop.f32.mrb[0].mxu0
      %v1393 = vadd.f32 %v1304, %v1392
      %1394 = vmatprep.mubr.f32.mxu0 0.0
      %1395 = vmatmul.mubr.f32.gmra.mrb[0].mxu0 %v1224
      %v1396 = vpop.f32.mrb[0].mxu0
      %v1397 = vadd.f32 %v1308, %v1396
      %v1398 = vpop.f32.mrb[0].mxu0
      %v1399 = vadd.f32 %v1310, %v1398
      %1400 = vmatprep.mubr.f32.mxu0 0.0
      %1401 = vmatmul.mubr.f32.gmra.mrb[0].mxu0 %v1227
      %v1402 = vpop.f32.mrb[0].mxu0
      %v1403 = vadd.f32 %v1314, %v1402
      %v1404 = vpop.f32.mrb[0].mxu0
      %v1405 = vadd.f32 %v1316, %v1404
      %1406 = vdwg.mxu0
      %v1407 = vmax.f32 %v1385, 0.0
      %v1408 = vmax.f32 %v1387, 0.0
      %v1409 = vmax.f32 %v1391, 0.0
      %v1410 = vmax.f32 %v1393, 0.0
      %v1411 = vmax.f32 %v1397, 0.0
      %v1412 = vmax.f32 %v1399, 0.0
      %v1413 = vmax.f32 %v1403, 0.0
      %v1414 = vmax.f32 %v1405, 0.0
      %1415 = vrot.lane.b32.xlu0 %v1407, 17
      %v1416 = vpop.permute.xlu0 %1415
      %1417 = vrot.lane.b32.xlu0 %v1409, 17
      %v1418 = vpop.permute.xlu0 %1417
      %1419 = vrot.lane.b32.xlu0 %v1411, 17
      %v1420 = vpop.permute.xlu0 %1419
      %1421 = vrot.lane.b32.xlu0 %v1413, 17
      %v1422 = vpop.permute.xlu0 %1421
      %1423 = vrot.lane.b32.xlu0 %v1408, 17
      %v1424 = vpop.permute.xlu0 %1423
      %1425 = vrot.lane.b32.xlu0 %v1410, 17
      %v1426 = vpop.permute.xlu0 %1425
      %1427 = vrot.lane.b32.xlu0 %v1412, 17
      %v1428 = vpop.permute.xlu0 %1427
      %1429 = vrot.lane.b32.xlu0 %v1414, 17
      %v1430 = vpop.permute.xlu0 %1429
      %v1431 = vsel %vm316, %v1416, %v1424
      %v1432 = vsel %vm316, %v1418, %v1426
      %v1433 = vsel %vm316, %v1420, %v1428
      %v1434 = vsel %vm316, %v1422, %v1430
      %v1435 = vsel %vm316, %v1424, %v1416
      %v1436 = vsel %vm316, %v1426, %v1418
      %v1437 = vsel %vm316, %v1428, %v1420
      %v1438 = vsel %vm316, %v1430, %v1422
      %v1439 = vld [vmem:[%s1] ss:$8 sm:$0x3]
      %v1441 = vlaneseq
      %v1442 = vshrl.u32 %v1441, 7
      %v1443 = vsub.s32 0, %v1442
      %v1444 = vrot.slane %v1439, %v1443
      %v1445 = vlaneseq
      %v1446 = vshrl.u32 %v1445, 7
      %v1447 = vsub.s32 1, %v1446
      %v1448 = vrot.slane %v1439, %v1447
      %v1451 = vmul.f32 %v1435, %v1444
      %v1452 = vmul.f32 %v1431, %v1448
      %v1453 = vmul.f32 %v1436, %v1444
      %v1454 = vmul.f32 %v1432, %v1448
      %v1455 = vmul.f32 %v1437, %v1444
      %v1456 = vmul.f32 %v1433, %v1448
      %v1457 = vmul.f32 %v1438, %v1444
      %v1458 = vmul.f32 %v1434, %v1448
      %1459 = vst [vmem:[#allocation2] sm:$0xff] %v1451
      %1460 = vst [vmem:[#allocation2 + $0x8] sm:$0xff] %v1452
      %1461 = vst [vmem:[#allocation2 + $0x10] sm:$0xff] %v1453
      %1462 = vst [vmem:[#allocation2 + $0x18] sm:$0xff] %v1454
      %1463 = vst [vmem:[#allocation2 + $0x20] sm:$0xff] %v1455
      %1464 = vst [vmem:[#allocation2 + $0x28] sm:$0xff] %v1456
      %1465 = vst [vmem:[#allocation2 + $0x30] sm:$0xff] %v1457
      %1466 = vst [vmem:[#allocation2 + $0x38] sm:$0xff] %v1458
      %1467 = vrot.lane.b32.xlu0 %v1407, 16
      %v1468 = vpop.permute.xlu0 %1467
      %1469 = vrot.lane.b32.xlu0 %v1409, 16
      %v1470 = vpop.permute.xlu0 %1469
      %1471 = vrot.lane.b32.xlu0 %v1411, 16
      %v1472 = vpop.permute.xlu0 %1471
      %1473 = vrot.lane.b32.xlu0 %v1413, 16
      %v1474 = vpop.permute.xlu0 %1473
      %1475 = vrot.lane.b32.xlu0 %v1408, 16
      %v1476 = vpop.permute.xlu0 %1475
      %1477 = vrot.lane.b32.xlu0 %v1410, 16
      %v1478 = vpop.permute.xlu0 %1477
      %1479 = vrot.lane.b32.xlu0 %v1412, 16
      %v1480 = vpop.permute.xlu0 %1479
      %1481 = vrot.lane.b32.xlu0 %v1414, 16
      %v1482 = vpop.permute.xlu0 %1481
      %v1483 = vsel %vm339, %v1468, %v1476
      %v1484 = vsel %vm339, %v1470, %v1478
      %v1485 = vsel %vm339, %v1472, %v1480
      %v1486 = vsel %vm339, %v1474, %v1482
      %v1487 = vsel %vm339, %v1476, %v1468
      %v1488 = vsel %vm339, %v1478, %v1470
      %v1489 = vsel %vm339, %v1480, %v1472
      %v1490 = vsel %vm339, %v1482, %v1474
      %v1491 = vld [vmem:[%s342] ss:$8 sm:$0x3]
      %v1493 = vlaneseq
      %v1494 = vshrl.u32 %v1493, 7
      %v1495 = vsub.s32 0, %v1494
      %v1496 = vrot.slane %v1491, %v1495
      %v1497 = vlaneseq
      %v1498 = vshrl.u32 %v1497, 7
      %v1499 = vsub.s32 1, %v1498
      %v1500 = vrot.slane %v1491, %v1499
      %v1503 = vmul.f32 %v1487, %v1496
      %v1504 = vmul.f32 %v1483, %v1500
      %v1505 = vmul.f32 %v1488, %v1496
      %v1506 = vmul.f32 %v1484, %v1500
      %v1507 = vmul.f32 %v1489, %v1496
      %v1508 = vmul.f32 %v1485, %v1500
      %v1509 = vmul.f32 %v1490, %v1496
      %v1510 = vmul.f32 %v1486, %v1500
      %1511 = vst [vmem:[#allocation2 + $0x40] sm:$0xff] %v1503
      %1512 = vst [vmem:[#allocation2 + $0x48] sm:$0xff] %v1504
      %1513 = vst [vmem:[#allocation2 + $0x50] sm:$0xff] %v1505
      %1514 = vst [vmem:[#allocation2 + $0x58] sm:$0xff] %v1506
      %1515 = vst [vmem:[#allocation2 + $0x60] sm:$0xff] %v1507
      %1516 = vst [vmem:[#allocation2 + $0x68] sm:$0xff] %v1508
      %1517 = vst [vmem:[#allocation2 + $0x70] sm:$0xff] %v1509
      %1518 = vst [vmem:[#allocation2 + $0x78] sm:$0xff] %v1510
      %1519 = vrot.lane.b32.xlu0 %v1407, 15
      %v1520 = vpop.permute.xlu0 %1519
      %1521 = vrot.lane.b32.xlu0 %v1409, 15
      %v1522 = vpop.permute.xlu0 %1521
      %1523 = vrot.lane.b32.xlu0 %v1411, 15
      %v1524 = vpop.permute.xlu0 %1523
      %1525 = vrot.lane.b32.xlu0 %v1413, 15
      %v1526 = vpop.permute.xlu0 %1525
      %1527 = vrot.lane.b32.xlu0 %v1408, 15
      %v1528 = vpop.permute.xlu0 %1527
      %1529 = vrot.lane.b32.xlu0 %v1410, 15
      %v1530 = vpop.permute.xlu0 %1529
      %1531 = vrot.lane.b32.xlu0 %v1412, 15
      %v1532 = vpop.permute.xlu0 %1531
      %1533 = vrot.lane.b32.xlu0 %v1414, 15
      %v1534 = vpop.permute.xlu0 %1533
      %v1535 = vsel %vm369, %v1520, %v1528
      %v1536 = vsel %vm369, %v1522, %v1530
      %v1537 = vsel %vm369, %v1524, %v1532
      %v1538 = vsel %vm369, %v1526, %v1534
      %v1539 = vsel %vm369, %v1528, %v1520
      %v1540 = vsel %vm369, %v1530, %v1522
      %v1541 = vsel %vm369, %v1532, %v1524
      %v1542 = vsel %vm369, %v1534, %v1526
      %v1543 = vld [vmem:[%s372] ss:$8 sm:$0x3]
      %v1545 = vlaneseq
      %v1546 = vshrl.u32 %v1545, 7
      %v1547 = vsub.s32 0, %v1546
      %v1548 = vrot.slane %v1543, %v1547
      %v1549 = vlaneseq
      %v1550 = vshrl.u32 %v1549, 7
      %v1551 = vsub.s32 1, %v1550
      %v1552 = vrot.slane %v1543, %v1551
      %v1555 = vmul.f32 %v1539, %v1548
      %v1556 = vmul.f32 %v1535, %v1552
      %v1557 = vmul.f32 %v1540, %v1548
      %v1558 = vmul.f32 %v1536, %v1552
      %v1559 = vmul.f32 %v1541, %v1548
      %v1560 = vmul.f32 %v1537, %v1552
      %v1561 = vmul.f32 %v1542, %v1548
      %v1562 = vmul.f32 %v1538, %v1552
      %1563 = vst [vmem:[#allocation2 + $0x80] sm:$0xff] %v1555
      %1564 = vst [vmem:[#allocation2 + $0x88] sm:$0xff] %v1556
      %1565 = vst [vmem:[#allocation2 + $0x90] sm:$0xff] %v1557
      %1566 = vst [vmem:[#allocation2 + $0x98] sm:$0xff] %v1558
      %1567 = vst [vmem:[#allocation2 + $0xa0] sm:$0xff] %v1559
      %1568 = vst [vmem:[#allocation2 + $0xa8] sm:$0xff] %v1560
      %1569 = vst [vmem:[#allocation2 + $0xb0] sm:$0xff] %v1561
      %1570 = vst [vmem:[#allocation2 + $0xb8] sm:$0xff] %v1562
      %1571 = vrot.lane.b32.xlu0 %v1407, 1
      %v1572 = vpop.permute.xlu0 %1571
      %1573 = vrot.lane.b32.xlu0 %v1409, 1
      %v1574 = vpop.permute.xlu0 %1573
      %1575 = vrot.lane.b32.xlu0 %v1411, 1
      %v1576 = vpop.permute.xlu0 %1575
      %1577 = vrot.lane.b32.xlu0 %v1413, 1
      %v1578 = vpop.permute.xlu0 %1577
      %1579 = vrot.lane.b32.xlu0 %v1408, 1
      %v1580 = vpop.permute.xlu0 %1579
      %1581 = vrot.lane.b32.xlu0 %v1410, 1
      %v1582 = vpop.permute.xlu0 %1581
      %1583 = vrot.lane.b32.xlu0 %v1412, 1
      %v1584 = vpop.permute.xlu0 %1583
      %1585 = vrot.lane.b32.xlu0 %v1414, 1
      %v1586 = vpop.permute.xlu0 %1585
      %v1587 = vsel %vm393, %v1572, %v1580
      %v1588 = vsel %vm393, %v1574, %v1582
      %v1589 = vsel %vm393, %v1576, %v1584
      %v1590 = vsel %vm393, %v1578, %v1586
      %v1591 = vsel %vm393, %v1580, %v1572
      %v1592 = vsel %vm393, %v1582, %v1574
      %v1593 = vsel %vm393, %v1584, %v1576
      %v1594 = vsel %vm393, %v1586, %v1578
      %v1595 = vld [vmem:[%s396] ss:$8 sm:$0x3]
      %v1597 = vlaneseq
      %v1598 = vshrl.u32 %v1597, 7
      %v1599 = vsub.s32 0, %v1598
      %v1600 = vrot.slane %v1595, %v1599
      %v1601 = vlaneseq
      %v1602 = vshrl.u32 %v1601, 7
      %v1603 = vsub.s32 1, %v1602
      %v1604 = vrot.slane %v1595, %v1603
      %v1607 = vmul.f32 %v1591, %v1600
      %v1608 = vmul.f32 %v1587, %v1604
      %v1609 = vmul.f32 %v1592, %v1600
      %v1610 = vmul.f32 %v1588, %v1604
      %v1611 = vmul.f32 %v1593, %v1600
      %v1612 = vmul.f32 %v1589, %v1604
      %v1613 = vmul.f32 %v1594, %v1600
      %v1614 = vmul.f32 %v1590, %v1604
      %1615 = vst [vmem:[#allocation2 + $0xc0] sm:$0xff] %v1607
      %1616 = vst [vmem:[#allocation2 + $0xc8] sm:$0xff] %v1608
      %1617 = vst [vmem:[#allocation2 + $0xd0] sm:$0xff] %v1609
      %1618 = vst [vmem:[#allocation2 + $0xd8] sm:$0xff] %v1610
      %1619 = vst [vmem:[#allocation2 + $0xe0] sm:$0xff] %v1611
      %1620 = vst [vmem:[#allocation2 + $0xe8] sm:$0xff] %v1612
      %1621 = vst [vmem:[#allocation2 + $0xf0] sm:$0xff] %v1613
      %1622 = vst [vmem:[#allocation2 + $0xf8] sm:$0xff] %v1614
      %1623 = vst [vmem:[#allocation2 + $0x100] sm:$0xff] %v1407
      %1624 = vst [vmem:[#allocation2 + $0x108] sm:$0xff] %v1408
      %1625 = vst [vmem:[#allocation2 + $0x110] sm:$0xff] %v1409
      %1626 = vst [vmem:[#allocation2 + $0x118] sm:$0xff] %v1410
      %1627 = vst [vmem:[#allocation2 + $0x120] sm:$0xff] %v1411
      %1628 = vst [vmem:[#allocation2 + $0x128] sm:$0xff] %v1412
      %1629 = vst [vmem:[#allocation2 + $0x130] sm:$0xff] %v1413
      %1630 = vst [vmem:[#allocation2 + $0x138] sm:$0xff] %v1414
      %1631 = vrot.lane.b32.xlu0 %v1407, 127
      %v1632 = vpop.permute.xlu0 %1631
      %1633 = vrot.lane.b32.xlu0 %v1409, 127
      %v1634 = vpop.permute.xlu0 %1633
      %1635 = vrot.lane.b32.xlu0 %v1411, 127
      %v1636 = vpop.permute.xlu0 %1635
      %1637 = vrot.lane.b32.xlu0 %v1413, 127
      %v1638 = vpop.permute.xlu0 %1637
      %1639 = vrot.lane.b32.xlu0 %v1408, 127
      %v1640 = vpop.permute.xlu0 %1639
      %1641 = vrot.lane.b32.xlu0 %v1410, 127
      %v1642 = vpop.permute.xlu0 %1641
      %1643 = vrot.lane.b32.xlu0 %v1412, 127
      %v1644 = vpop.permute.xlu0 %1643
      %1645 = vrot.lane.b32.xlu0 %v1414, 127
      %v1646 = vpop.permute.xlu0 %1645
      %v1647 = vsel %vm425, %v1632, %v1640
      %v1648 = vsel %vm425, %v1634, %v1642
      %v1649 = vsel %vm425, %v1636, %v1644
      %v1650 = vsel %vm425, %v1638, %v1646
      %v1651 = vsel %vm425, %v1640, %v1632
      %v1652 = vsel %vm425, %v1642, %v1634
      %v1653 = vsel %vm425, %v1644, %v1636
      %v1654 = vsel %vm425, %v1646, %v1638
      %v1655 = vld [vmem:[%s428] ss:$8 sm:$0x3]
      %v1657 = vlaneseq
      %v1658 = vshrl.u32 %v1657, 7
      %v1659 = vsub.s32 0, %v1658
      %v1660 = vrot.slane %v1655, %v1659
      %v1661 = vlaneseq
      %v1662 = vshrl.u32 %v1661, 7
      %v1663 = vsub.s32 1, %v1662
      %v1664 = vrot.slane %v1655, %v1663
      %v1667 = vmul.f32 %v1647, %v1660
      %v1668 = vmul.f32 %v1651, %v1664
      %v1669 = vmul.f32 %v1648, %v1660
      %v1670 = vmul.f32 %v1652, %v1664
      %v1671 = vmul.f32 %v1649, %v1660
      %v1672 = vmul.f32 %v1653, %v1664
      %v1673 = vmul.f32 %v1650, %v1660
      %v1674 = vmul.f32 %v1654, %v1664
      %1675 = vst [vmem:[#allocation2 + $0x140] sm:$0xff] %v1667
      %1676 = vst [vmem:[#allocation2 + $0x148] sm:$0xff] %v1668
      %1677 = vst [vmem:[#allocation2 + $0x150] sm:$0xff] %v1669
      %1678 = vst [vmem:[#allocation2 + $0x158] sm:$0xff] %v1670
      %1679 = vst [vmem:[#allocation2 + $0x160] sm:$0xff] %v1671
      %1680 = vst [vmem:[#allocation2 + $0x168] sm:$0xff] %v1672
      %1681 = vst [vmem:[#allocation2 + $0x170] sm:$0xff] %v1673
      %1682 = vst [vmem:[#allocation2 + $0x178] sm:$0xff] %v1674
      %1683 = vrot.lane.b32.xlu0 %v1407, 113
      %v1684 = vpop.permute.xlu0 %1683
      %1685 = vrot.lane.b32.xlu0 %v1409, 113
      %v1686 = vpop.permute.xlu0 %1685
      %1687 = vrot.lane.b32.xlu0 %v1411, 113
      %v1688 = vpop.permute.xlu0 %1687
      %1689 = vrot.lane.b32.xlu0 %v1413, 113
      %v1690 = vpop.permute.xlu0 %1689
      %1691 = vrot.lane.b32.xlu0 %v1408, 113
      %v1692 = vpop.permute.xlu0 %1691
      %1693 = vrot.lane.b32.xlu0 %v1410, 113
      %v1694 = vpop.permute.xlu0 %1693
      %1695 = vrot.lane.b32.xlu0 %v1412, 113
      %v1696 = vpop.permute.xlu0 %1695
      %1697 = vrot.lane.b32.xlu0 %v1414, 113
      %v1698 = vpop.permute.xlu0 %1697
      %v1699 = vsel %vm455, %v1684, %v1692
      %v1700 = vsel %vm455, %v1686, %v1694
      %v1701 = vsel %vm455, %v1688, %v1696
      %v1702 = vsel %vm455, %v1690, %v1698
      %v1703 = vsel %vm455, %v1692, %v1684
      %v1704 = vsel %vm455, %v1694, %v1686
      %v1705 = vsel %vm455, %v1696, %v1688
      %v1706 = vsel %vm455, %v1698, %v1690
      %v1707 = vld [vmem:[%s458] ss:$8 sm:$0x3]
      %v1709 = vlaneseq
      %v1710 = vshrl.u32 %v1709, 7
      %v1711 = vsub.s32 0, %v1710
      %v1712 = vrot.slane %v1707, %v1711
      %v1713 = vlaneseq
      %v1714 = vshrl.u32 %v1713, 7
      %v1715 = vsub.s32 1, %v1714
      %v1716 = vrot.slane %v1707, %v1715
      %v1719 = vmul.f32 %v1699, %v1712
      %v1720 = vmul.f32 %v1703, %v1716
      %v1721 = vmul.f32 %v1700, %v1712
      %v1722 = vmul.f32 %v1704, %v1716
      %v1723 = vmul.f32 %v1701, %v1712
      %v1724 = vmul.f32 %v1705, %v1716
      %v1725 = vmul.f32 %v1702, %v1712
      %v1726 = vmul.f32 %v1706, %v1716
      %1727 = vst [vmem:[#allocation2 + $0x180] sm:$0xff] %v1719
      %1728 = vst [vmem:[#allocation2 + $0x188] sm:$0xff] %v1720
      %1729 = vst [vmem:[#allocation2 + $0x190] sm:$0xff] %v1721
      %1730 = vst [vmem:[#allocation2 + $0x198] sm:$0xff] %v1722
      %1731 = vst [vmem:[#allocation2 + $0x1a0] sm:$0xff] %v1723
      %1732 = vst [vmem:[#allocation2 + $0x1a8] sm:$0xff] %v1724
      %1733 = vst [vmem:[#allocation2 + $0x1b0] sm:$0xff] %v1725
      %1734 = vst [vmem:[#allocation2 + $0x1b8] sm:$0xff] %v1726
      %1735 = vrot.lane.b32.xlu0 %v1407, 112
      %v1736 = vpop.permute.xlu0 %1735
      %1737 = vrot.lane.b32.xlu0 %v1409, 112
      %v1738 = vpop.permute.xlu0 %1737
      %1739 = vrot.lane.b32.xlu0 %v1411, 112
      %v1740 = vpop.permute.xlu0 %1739
      %1741 = vrot.lane.b32.xlu0 %v1413, 112
      %v1742 = vpop.permute.xlu0 %1741
      %1743 = vrot.lane.b32.xlu0 %v1408, 112
      %v1744 = vpop.permute.xlu0 %1743
      %1745 = vrot.lane.b32.xlu0 %v1410, 112
      %v1746 = vpop.permute.xlu0 %1745
      %1747 = vrot.lane.b32.xlu0 %v1412, 112
      %v1748 = vpop.permute.xlu0 %1747
      %1749 = vrot.lane.b32.xlu0 %v1414, 112
      %v1750 = vpop.permute.xlu0 %1749
      %v1751 = vsel %vm479, %v1736, %v1744
      %v1752 = vsel %vm479, %v1738, %v1746
      %v1753 = vsel %vm479, %v1740, %v1748
      %v1754 = vsel %vm479, %v1742, %v1750
      %v1755 = vsel %vm479, %v1744, %v1736
      %v1756 = vsel %vm479, %v1746, %v1738
      %v1757 = vsel %vm479, %v1748, %v1740
      %v1758 = vsel %vm479, %v1750, %v1742
      %v1759 = vld [vmem:[%s482] ss:$8 sm:$0x3]
      %v1761 = vlaneseq
      %v1762 = vshrl.u32 %v1761, 7
      %v1763 = vsub.s32 0, %v1762
      %v1764 = vrot.slane %v1759, %v1763
      %v1765 = vlaneseq
      %v1766 = vshrl.u32 %v1765, 7
      %v1767 = vsub.s32 1, %v1766
      %v1768 = vrot.slane %v1759, %v1767
      %v1771 = vmul.f32 %v1751, %v1764
      %v1772 = vmul.f32 %v1755, %v1768
      %v1773 = vmul.f32 %v1752, %v1764
      %v1774 = vmul.f32 %v1756, %v1768
      %v1775 = vmul.f32 %v1753, %v1764
      %v1776 = vmul.f32 %v1757, %v1768
      %v1777 = vmul.f32 %v1754, %v1764
      %v1778 = vmul.f32 %v1758, %v1768
      %1779 = vst [vmem:[#allocation2 + $0x1c0] sm:$0xff] %v1771
      %1780 = vst [vmem:[#allocation2 + $0x1c8] sm:$0xff] %v1772
      %1781 = vst [vmem:[#allocation2 + $0x1d0] sm:$0xff] %v1773
      %1782 = vst [vmem:[#allocation2 + $0x1d8] sm:$0xff] %v1774
      %1783 = vst [vmem:[#allocation2 + $0x1e0] sm:$0xff] %v1775
      %1784 = vst [vmem:[#allocation2 + $0x1e8] sm:$0xff] %v1776
      %1785 = vst [vmem:[#allocation2 + $0x1f0] sm:$0xff] %v1777
      %1786 = vst [vmem:[#allocation2 + $0x1f8] sm:$0xff] %v1778
      %1787 = vrot.lane.b32.xlu0 %v1407, 111
      %v1788 = vpop.permute.xlu0 %1787
      %1789 = vrot.lane.b32.xlu0 %v1409, 111
      %v1790 = vpop.permute.xlu0 %1789
      %1791 = vrot.lane.b32.xlu0 %v1411, 111
      %v1792 = vpop.permute.xlu0 %1791
      %1793 = vrot.lane.b32.xlu0 %v1413, 111
      %v1794 = vpop.permute.xlu0 %1793
      %1795 = vrot.lane.b32.xlu0 %v1408, 111
      %v1796 = vpop.permute.xlu0 %1795
      %1797 = vrot.lane.b32.xlu0 %v1410, 111
      %v1798 = vpop.permute.xlu0 %1797
      %1799 = vrot.lane.b32.xlu0 %v1412, 111
      %v1800 = vpop.permute.xlu0 %1799
      %1801 = vrot.lane.b32.xlu0 %v1414, 111
      %v1802 = vpop.permute.xlu0 %1801
      %v1803 = vsel %vm509, %v1788, %v1796
      %v1804 = vsel %vm509, %v1790, %v1798
      %v1805 = vsel %vm509, %v1792, %v1800
      %v1806 = vsel %vm509, %v1794, %v1802
      %v1807 = vsel %vm509, %v1796, %v1788
      %v1808 = vsel %vm509, %v1798, %v1790
      %v1809 = vsel %vm509, %v1800, %v1792
      %v1810 = vsel %vm509, %v1802, %v1794
      %v1811 = vld [vmem:[%s512] ss:$8 sm:$0x3]
      %v1813 = vlaneseq
      %v1814 = vshrl.u32 %v1813, 7
      %v1815 = vsub.s32 0, %v1814
      %v1816 = vrot.slane %v1811, %v1815
      %v1817 = vlaneseq
      %v1818 = vshrl.u32 %v1817, 7
      %v1819 = vsub.s32 1, %v1818
      %v1820 = vrot.slane %v1811, %v1819
      %v1823 = vmul.f32 %v1803, %v1816
      %v1824 = vmul.f32 %v1807, %v1820
      %v1825 = vmul.f32 %v1804, %v1816
      %v1826 = vmul.f32 %v1808, %v1820
      %v1827 = vmul.f32 %v1805, %v1816
      %v1828 = vmul.f32 %v1809, %v1820
      %v1829 = vmul.f32 %v1806, %v1816
      %v1830 = vmul.f32 %v1810, %v1820
      %1831 = vst [vmem:[#allocation2 + $0x200] sm:$0xff] %v1823
      %1832 = vst [vmem:[#allocation2 + $0x208] sm:$0xff] %v1824
      %1833 = vst [vmem:[#allocation2 + $0x210] sm:$0xff] %v1825
      %1834 = vst [vmem:[#allocation2 + $0x218] sm:$0xff] %v1826
      %1835 = vst [vmem:[#allocation2 + $0x220] sm:$0xff] %v1827
      %1836 = vst [vmem:[#allocation2 + $0x228] sm:$0xff] %v1828
      %1837 = vst [vmem:[#allocation2 + $0x230] sm:$0xff] %v1829
      %1838 = vst [vmem:[#allocation2 + $0x238] sm:$0xff] %v1830
      %v1839 = vld [vmem:[%s6] sm:$0xff]
      %v1840 = vld [vmem:[%s6 + $0x8] sm:$0xff]
      %v1841 = vld [vmem:[%s6 + $0x10] sm:$0xff]
      %v1842 = vld [vmem:[%s6 + $0x18] sm:$0xff]
      %v1843 = vld [vmem:[%s6 + $0x20] sm:$0xff]
      %v1844 = vld [vmem:[%s6 + $0x28] sm:$0xff]
      %v1845 = vld [vmem:[%s6 + $0x30] sm:$0xff]
      %v1846 = vld [vmem:[%s6 + $0x38] sm:$0xff]
      %v1847 = vld [vmem:[%s6 + $0x40] sm:$0xff]
      %v1848 = vld [vmem:[%s6 + $0x48] sm:$0xff]
      %v1849 = vld [vmem:[%s6 + $0x50] sm:$0xff]
      %v1850 = vld [vmem:[%s6 + $0x58] sm:$0xff]
      %v1851 = vld [vmem:[#allocation2] sm:$0xff]
      %v1852 = vld [vmem:[#allocation2 + $0x8] sm:$0xff]
      %v1853 = vld [vmem:[#allocation2 + $0x10] sm:$0xff]
      %v1854 = vld [vmem:[#allocation2 + $0x18] sm:$0xff]
      %v1855 = vld [vmem:[#allocation2 + $0x20] sm:$0xff]
      %v1856 = vld [vmem:[#allocation2 + $0x28] sm:$0xff]
      %v1857 = vld [vmem:[#allocation2 + $0x30] sm:$0xff]
      %v1858 = vld [vmem:[#allocation2 + $0x38] sm:$0xff]
      %v1859 = vld [vmem:[#allocation2 + $0x40] sm:$0xff]
      %v1860 = vld [vmem:[#allocation2 + $0x48] sm:$0xff]
      %v1861 = vld [vmem:[#allocation2 + $0x50] sm:$0xff]
      %v1862 = vld [vmem:[#allocation2 + $0x58] sm:$0xff]
      %v1863 = vld [vmem:[#allocation2 + $0x60] sm:$0xff]
      %v1864 = vld [vmem:[#allocation2 + $0x68] sm:$0xff]
      %v1865 = vld [vmem:[#allocation2 + $0x70] sm:$0xff]
      %v1866 = vld [vmem:[#allocation2 + $0x78] sm:$0xff]
      %v1867 = vld [vmem:[#allocation2 + $0x80] sm:$0xff]
      %v1868 = vld [vmem:[#allocation2 + $0x88] sm:$0xff]
      %v1869 = vld [vmem:[#allocation2 + $0x90] sm:$0xff]
      %v1870 = vld [vmem:[#allocation2 + $0x98] sm:$0xff]
      %v1871 = vld [vmem:[#allocation2 + $0xa0] sm:$0xff]
      %v1872 = vld [vmem:[#allocation2 + $0xa8] sm:$0xff]
      %v1873 = vld [vmem:[#allocation2 + $0xb0] sm:$0xff]
      %v1874 = vld [vmem:[#allocation2 + $0xb8] sm:$0xff]
      %v1875 = vld [vmem:[#allocation2 + $0xc0] sm:$0xff]
      %v1876 = vld [vmem:[#allocation2 + $0xc8] sm:$0xff]
      %v1877 = vld [vmem:[#allocation2 + $0xd0] sm:$0xff]
      %v1878 = vld [vmem:[#allocation2 + $0xd8] sm:$0xff]
      %v1879 = vld [vmem:[#allocation2 + $0xe0] sm:$0xff]
      %v1880 = vld [vmem:[#allocation2 + $0xe8] sm:$0xff]
      %v1881 = vld [vmem:[#allocation2 + $0xf0] sm:$0xff]
      %v1882 = vld [vmem:[#allocation2 + $0xf8] sm:$0xff]
      %v1883 = vld [vmem:[#allocation2 + $0x100] sm:$0xff]
      %v1884 = vld [vmem:[#allocation2 + $0x108] sm:$0xff]
      %v1885 = vld [vmem:[#allocation2 + $0x110] sm:$0xff]
      %v1886 = vld [vmem:[#allocation2 + $0x118] sm:$0xff]
      %v1887 = vld [vmem:[#allocation2 + $0x120] sm:$0xff]
      %v1888 = vld [vmem:[#allocation2 + $0x128] sm:$0xff]
      %v1889 = vld [vmem:[#allocation2 + $0x130] sm:$0xff]
      %v1890 = vld [vmem:[#allocation2 + $0x138] sm:$0xff]
      %v1891 = vld [vmem:[#allocation2 + $0x140] sm:$0xff]
      %v1892 = vld [vmem:[#allocation2 + $0x148] sm:$0xff]
      %v1893 = vld [vmem:[#allocation2 + $0x150] sm:$0xff]
      %v1894 = vld [vmem:[#allocation2 + $0x158] sm:$0xff]
      %v1895 = vld [vmem:[#allocation2 + $0x160] sm:$0xff]
      %v1896 = vld [vmem:[#allocation2 + $0x168] sm:$0xff]
      %v1897 = vld [vmem:[#allocation2 + $0x170] sm:$0xff]
      %v1898 = vld [vmem:[#allocation2 + $0x178] sm:$0xff]
      %v1899 = vld [vmem:[#allocation2 + $0x180] sm:$0xff]
      %v1900 = vld [vmem:[#allocation2 + $0x188] sm:$0xff]
      %v1901 = vld [vmem:[#allocation2 + $0x190] sm:$0xff]
      %v1902 = vld [vmem:[#allocation2 + $0x198] sm:$0xff]
      %v1903 = vld [vmem:[#allocation2 + $0x1a0] sm:$0xff]
      %v1904 = vld [vmem:[#allocation2 + $0x1a8] sm:$0xff]
      %v1905 = vld [vmem:[#allocation2 + $0x1b0] sm:$0xff]
      %v1906 = vld [vmem:[#allocation2 + $0x1b8] sm:$0xff]
      %v1907 = vld [vmem:[#allocation2 + $0x1c0] sm:$0xff]
      %v1908 = vld [vmem:[#allocation2 + $0x1c8] sm:$0xff]
      %v1909 = vld [vmem:[#allocation2 + $0x1d0] sm:$0xff]
      %v1910 = vld [vmem:[#allocation2 + $0x1d8] sm:$0xff]
      %v1911 = vld [vmem:[#allocation2 + $0x1e0] sm:$0xff]
      %v1912 = vld [vmem:[#allocation2 + $0x1e8] sm:$0xff]
      %v1913 = vld [vmem:[#allocation2 + $0x1f0] sm:$0xff]
      %v1914 = vld [vmem:[#allocation2 + $0x1f8] sm:$0xff]
      %v1915 = vld [vmem:[#allocation2 + $0x200] sm:$0xff]
      %v1916 = vld [vmem:[#allocation2 + $0x208] sm:$0xff]
      %v1917 = vld [vmem:[#allocation2 + $0x210] sm:$0xff]
      %v1918 = vld [vmem:[#allocation2 + $0x218] sm:$0xff]
      %v1919 = vld [vmem:[#allocation2 + $0x220] sm:$0xff]
      %v1920 = vld [vmem:[#allocation2 + $0x228] sm:$0xff]
      %v1921 = vld [vmem:[#allocation2 + $0x230] sm:$0xff]
      %v1922 = vld [vmem:[#allocation2 + $0x238] sm:$0xff]
      %v1923 = vld [vmem:[%s7] sm:$0xff]
      %v1924 = vld [vmem:[%s7 + $0x8] sm:$0xff]
      %v1925 = vld [vmem:[%s7 + $0x10] sm:$0xff]
      %v1926 = vld [vmem:[%s7 + $0x18] sm:$0xff]
      %1928 = vset.pattern.permute.xlu0 0
      %1929 = vperm.xlu0 %1928, %v1923
      %v1930 = vpop.permute.xlu0 %1929
      %1933 = vset.pattern.permute.xlu0 0
      %1934 = vperm.xlu0 %1933, %v1924
      %v1935 = vpop.permute.xlu0 %1934
      %1938 = vset.pattern.permute.xlu0 0
      %1939 = vperm.xlu0 %1938, %v1925
      %v1940 = vpop.permute.xlu0 %1939
      %1943 = vset.pattern.permute.xlu0 0
      %1944 = vperm.xlu0 %1943, %v1926
      %v1945 = vpop.permute.xlu0 %1944
      %v1948 = vsel %vm1216, %v1841, 0
      %v1951 = vsel %vm1216, %v1844, 0
      %v1954 = vsel %vm1216, %v1847, 0
      %v1957 = vsel %vm1216, %v1850, 0
      %1959 = vmatprep.subr.mxu0 %v1852
      %1960 = vmatpush1.msra.mxu0 %v1851
      %1961 = vmatprep.subr.mxu0 %v1854
      %1962 = vmatpush1.msra.mxu0 %v1853
      %1963 = vmatprep.subr.mxu0 %v1856
      %1964 = vmatpush1.msra.mxu0 %v1855
      %1965 = vmatprep.subr.mxu0 %v1858
      %1966 = vmatpush1.msra.mxu0 %v1857
      %1967 = vmatprep.subr.mxu0 %v1860
      %1968 = vmatpush1.msra.mxu0 %v1859
      %1969 = vmatprep.subr.mxu0 %v1862
      %1970 = vmatpush1.msra.mxu0 %v1861
      %1971 = vmatprep.subr.mxu0 %v1864
      %1972 = vmatpush1.msra.mxu0 %v1863
      %1973 = vmatprep.subr.mxu0 %v1866
      %1974 = vmatpush1.msra.mxu0 %v1865
      %1975 = vmatprep.subr.mxu0 %v1868
      %1976 = vmatpush1.msra.mxu0 %v1867
      %1977 = vmatprep.subr.mxu0 %v1870
      %1978 = vmatpush1.msra.mxu0 %v1869
      %1979 = vmatprep.subr.mxu0 %v1872
      %1980 = vmatpush1.msra.mxu0 %v1871
      %1981 = vmatprep.subr.mxu0 %v1874
      %1982 = vmatpush1.msra.mxu0 %v1873
      %1983 = vmatprep.subr.mxu0 %v1876
      %1984 = vmatpush1.msra.mxu0 %v1875
      %1985 = vmatprep.subr.mxu0 %v1878
      %1986 = vmatpush1.msra.mxu0 %v1877
      %1987 = vmatprep.subr.mxu0 %v1880
      %1988 = vmatpush1.msra.mxu0 %v1879
      %1989 = vmatprep.subr.mxu0 %v1882
      %1990 = vmatpush1.msra.mxu0 %v1881
      %1991 = vmatprep.subr.mxu0 %v1884
      %1992 = vmatpush1.msra.mxu0 %v1883
      %1993 = vmatprep.subr.mxu0 %v1886
      %1994 = vmatpush1.msra.mxu0 %v1885
      %1995 = vmatprep.subr.mxu0 %v1888
      %1996 = vmatpush1.msra.mxu0 %v1887
      %1997 = vmatprep.subr.mxu0 %v1890
      %1998 = vmatpush1.msra.mxu0 %v1889
      %1999 = vmatprep.subr.mxu0 %v1892
      %2000 = vmatpush1.msra.mxu0 %v1891
      %2001 = vmatprep.subr.mxu0 %v1894
      %2002 = vmatpush1.msra.mxu0 %v1893
      %2003 = vmatprep.subr.mxu0 %v1896
      %2004 = vmatpush1.msra.mxu0 %v1895
      %2005 = vmatprep.subr.mxu0 %v1898
      %2006 = vmatpush1.msra.mxu0 %v1897
      %2007 = vmatprep.subr.mxu0 %v1900
      %2008 = vmatpush1.msra.mxu0 %v1899
      %2009 = vmatprep.subr.mxu0 %v1902
      %2010 = vmatpush1.msra.mxu0 %v1901
      %2011 = vmatprep.subr.mxu0 %v1904
      %2012 = vmatpush1.msra.mxu0 %v1903
      %2013 = vmatprep.subr.mxu0 %v1906
      %2014 = vmatpush1.msra.mxu0 %v1905
      %2015 = vmatprep.subr.mxu0 %v1908
      %2016 = vmatpush1.msra.mxu0 %v1907
      %2017 = vmatprep.subr.mxu0 %v1910
      %2018 = vmatpush1.msra.mxu0 %v1909
      %2019 = vmatprep.subr.mxu0 %v1912
      %2020 = vmatpush1.msra.mxu0 %v1911
      %2021 = vmatprep.subr.mxu0 %v1914
      %2022 = vmatpush1.msra.mxu0 %v1913
      %2023 = vmatprep.mubr.f32.mxu0 %v1840
      %2024 = vmatmul.mubr.f32.gmra.mrb[0].mxu0 %v1839
      %v2025 = vpop.f32.mrb[0].mxu0
      %v2026 = vadd.f32 %v1930, %v2025
      %v2027 = vpop.f32.mrb[0].mxu0
      %v2028 = vadd.f32 %v1930, %v2027
      %2029 = vmatprep.mubr.f32.mxu0 %v1843
      %2030 = vmatmul.mubr.f32.gmra.mrb[0].mxu0 %v1842
      %v2031 = vpop.f32.mrb[0].mxu0
      %v2032 = vadd.f32 %v1935, %v2031
      %v2033 = vpop.f32.mrb[0].mxu0
      %v2034 = vadd.f32 %v1935, %v2033
      %2035 = vmatprep.mubr.f32.mxu0 %v1846
      %2036 = vmatmul.mubr.f32.gmra.mrb[0].mxu0 %v1845
      %v2037 = vpop.f32.mrb[0].mxu0
      %v2038 = vadd.f32 %v1940, %v2037
      %v2039 = vpop.f32.mrb[0].mxu0
      %v2040 = vadd.f32 %v1940, %v2039
      %2041 = vmatprep.mubr.f32.mxu0 %v1849
      %2042 = vmatmul.mubr.f32.gmra.mrb[0].mxu0 %v1848
      %v2043 = vpop.f32.mrb[0].mxu0
      %v2044 = vadd.f32 %v1945, %v2043
      %v2045 = vpop.f32.mrb[0].mxu0
      %v2046 = vadd.f32 %v1945, %v2045
      %2047 = vdwg.mxu0
      %2048 = vmatprep.subr.mxu0 %v1916
      %2049 = vmatpush1.msra.mxu0 %v1915
      %2050 = vmatprep.subr.mxu0 %v1918
      %2051 = vmatpush1.msra.mxu0 %v1917
      %2052 = vmatprep.subr.mxu0 %v1920
      %2053 = vmatpush1.msra.mxu0 %v1919
      %2054 = vmatprep.subr.mxu0 %v1922
      %2055 = vmatpush1.msra.mxu0 %v1921
      %2056 = vmatprep.subr.mxu0 0.0
      %2057 = vmatpush1.msra.mxu0 0.0
      %2058 = vmatprep.subr.mxu0 0.0
      %2059 = vmatpush1.msra.mxu0 0.0
      %2060 = vmatprep.subr.mxu0 0.0
      %2061 = vmatpush1.msra.mxu0 0.0
      %2062 = vmatprep.subr.mxu0 0.0
      %2063 = vmatpush1.msra.mxu0 0.0
      %2064 = vmatprep.subr.mxu0 0.0
      %2065 = vmatpush1.msra.mxu0 0.0
      %2066 = vmatprep.subr.mxu0 0.0
      %2067 = vmatpush1.msra.mxu0 0.0
      %2068 = vmatprep.subr.mxu0 0.0
      %2069 = vmatpush1.msra.mxu0 0.0
      %2070 = vmatprep.subr.mxu0 0.0
      %2071 = vmatpush1.msra.mxu0 0.0
      %2072 = vmatprep.subr.mxu0 0.0
      %2073 = vmatpush1.msra.mxu0 0.0
      %2074 = vmatprep.subr.mxu0 0.0
      %2075 = vmatpush1.msra.mxu0 0.0
      %2076 = vmatprep.subr.mxu0 0.0
      %2077 = vmatpush1.msra.mxu0 0.0
      %2078 = vmatprep.subr.mxu0 0.0
      %2079 = vmatpush1.msra.mxu0 0.0
      %2080 = vmatprep.subr.mxu0 0.0
      %2081 = vmatpush1.msra.mxu0 0.0
      %2082 = vmatprep.subr.mxu0 0.0
      %2083 = vmatpush1.msra.mxu0 0.0
      %2084 = vmatprep.subr.mxu0 0.0
      %2085 = vmatpush1.msra.mxu0 0.0
      %2086 = vmatprep.subr.mxu0 0.0
      %2087 = vmatpush1.msra.mxu0 0.0
      %2088 = vmatprep.subr.mxu0 0.0
      %2089 = vmatpush1.msra.mxu0 0.0
      %2090 = vmatprep.subr.mxu0 0.0
      %2091 = vmatpush1.msra.mxu0 0.0
      %2092 = vmatprep.subr.mxu0 0.0
      %2093 = vmatpush1.msra.mxu0 0.0
      %2094 = vmatprep.subr.mxu0 0.0
      %2095 = vmatpush1.msra.mxu0 0.0
      %2096 = vmatprep.subr.mxu0 0.0
      %2097 = vmatpush1.msra.mxu0 0.0
      %2098 = vmatprep.subr.mxu0 0.0
      %2099 = vmatpush1.msra.mxu0 0.0
      %2100 = vmatprep.subr.mxu0 0.0
      %2101 = vmatpush1.msra.mxu0 0.0
      %2102 = vmatprep.subr.mxu0 0.0
      %2103 = vmatpush1.msra.mxu0 0.0
      %2104 = vmatprep.subr.mxu0 0.0
      %2105 = vmatpush1.msra.mxu0 0.0
      %2106 = vmatprep.subr.mxu0 0.0
      %2107 = vmatpush1.msra.mxu0 0.0
      %2108 = vmatprep.subr.mxu0 0.0
      %2109 = vmatpush1.msra.mxu0 0.0
      %2110 = vmatprep.subr.mxu0 0.0
      %2111 = vmatpush1.msra.mxu0 0.0
      %2112 = vmatprep.mubr.f32.mxu0 0.0
      %2113 = vmatmul.mubr.f32.gmra.mrb[0].mxu0 %v1948
      %v2114 = vpop.f32.mrb[0].mxu0
      %v2115 = vadd.f32 %v2026, %v2114
      %v2116 = vpop.f32.mrb[0].mxu0
      %v2117 = vadd.f32 %v2028, %v2116
      %2118 = vmatprep.mubr.f32.mxu0 0.0
      %2119 = vmatmul.mubr.f32.gmra.mrb[0].mxu0 %v1951
      %v2120 = vpop.f32.mrb[0].mxu0
      %v2121 = vadd.f32 %v2032, %v2120
      %v2122 = vpop.f32.mrb[0].mxu0
      %v2123 = vadd.f32 %v2034, %v2122
      %2124 = vmatprep.mubr.f32.mxu0 0.0
      %2125 = vmatmul.mubr.f32.gmra.mrb[0].mxu0 %v1954
      %v2126 = vpop.f32.mrb[0].mxu0
      %v2127 = vadd.f32 %v2038, %v2126
      %v2128 = vpop.f32.mrb[0].mxu0
      %v2129 = vadd.f32 %v2040, %v2128
      %2130 = vmatprep.mubr.f32.mxu0 0.0
      %2131 = vmatmul.mubr.f32.gmra.mrb[0].mxu0 %v1957
      %v2132 = vpop.f32.mrb[0].mxu0
      %v2133 = vadd.f32 %v2044, %v2132
      %v2134 = vpop.f32.mrb[0].mxu0
      %v2135 = vadd.f32 %v2046, %v2134
      %2136 = vdwg.mxu0
      %v2137 = vmul.f32 %v676, 2.0
      %v2138 = vmul.f32 %v677, 2.0
      %v2139 = vmul.f32 %v678, 2.0
      %v2140 = vmul.f32 %v679, 2.0
      %v2141 = vmul.f32 %v680, 2.0
      %v2142 = vmul.f32 %v681, 2.0
      %v2143 = vmul.f32 %v682, 2.0
      %v2144 = vmul.f32 %v683, 2.0
      %v2145 = vadd.f32 %v2115, %v2137
      %v2146 = vadd.f32 %v2117, %v2138
      %v2147 = vadd.f32 %v2121, %v2139
      %v2148 = vadd.f32 %v2123, %v2140
      %v2149 = vadd.f32 %v2127, %v2141
      %v2150 = vadd.f32 %v2129, %v2142
      %v2151 = vadd.f32 %v2133, %v2143
      %v2152 = vadd.f32 %v2135, %v2144
      %2153 = vst [vmem:[%s305] sm:$0xff] %v2145
      %2154 = vst [vmem:[%s305 + $0x8] sm:$0xff] %v2146
      %2155 = vst [vmem:[%s305 + $0x10] sm:$0xff] %v2147
      %2156 = vst [vmem:[%s305 + $0x18] sm:$0xff] %v2148
      %2157 = vst [vmem:[%s305 + $0x20] sm:$0xff] %v2149
      %2158 = vst [vmem:[%s305 + $0x28] sm:$0xff] %v2150
      %2159 = vst [vmem:[%s305 + $0x30] sm:$0xff] %v2151
      %2160 = vst [vmem:[%s305 + $0x38] sm:$0xff] %v2152
      %p2161 = scmp.lt.s32.totalorder %s19, 1
      %s2162 = scalar_select %p2161, %s19, 1
      %s2163 = smul.addr %s2162, 8
      %s2164 = smul.addr %s2163, 8
      %s2165 = scalar_lea.vmem %s8, %s2164
      // Predicated region
      $region53: #{input_conv_forward.1} parent=51 // pred_check
        %p2166 = pneg %p210
      $region54: #{input_conv_forward.1} parent=51 // pred_check_branch
        %2168 = sbr.rel (%p2166) target = $region56
      $region55: #{input_conv_forward.1} parent=51 // pred_region
        _
      $region56: #{input_conv_forward.1} parent=51 // pred_fallthru
        _
    $region52: #{input_conv_forward.1} parent=5 // pred_fallthru
      _
    %p2169 = scmp.le.s32.totalorder 2, %s14
    // Predicated region
    $region57: #{input_conv_forward.1} parent=5 // pred_check
      %p2170 = pneg %p2169
    $region58: #{input_conv_forward.1} parent=5 // pred_check_branch
      %2172 = sbr.rel (%p2170) target = $region60
    $region59: #{input_conv_forward.1} parent=5 // pred_region
      %s2173 = ssub.s32 %s14, 2
      // Predicated region
      $region61: #{input_conv_forward.1} parent=59 // pred_check
        %p2174 = pneg %p216
      $region62: #{input_conv_forward.1} parent=59 // pred_check_branch
        %2176 = sbr.rel (%p2174) target = $region64
      $region63: #{input_conv_forward.1} parent=59 // pred_region
        %p2177 = scmp.lt.s32.totalorder %s20, 1
        %s2178 = scalar_select %p2177, %s20, 1
        %s2179 = smul.addr %s2178, 8
        %s2180 = smul.addr %s2179, 8
        %s2181 = scalar_lea.vmem %s8, %s2180
      $region64: #{input_conv_forward.1} parent=59 // pred_fallthru
        _
    $region60: #{input_conv_forward.1} parent=5 // pred_fallthru
      _
  $region6: #{input_conv_forward.1} parent=0 // loop_footer
    %s18 = sadd.s32 1, %s14
  $region7: #{input_conv_forward.1} parent=0 // loop_footer_branch
    %13 = sbr.rel target = $region3
  $region8: #{input_conv_forward.1} parent=0 // loop_exit
    _

</llo_original>
